<compile_context>
chip_gen: v6e
topology: v6e:2x2x1
jax: 0.10.0
libtpu: 0.0.40
codegen_flags: <defaults>
</compile_context>

<pallas_src>
import jax
import jax.numpy as jnp
from jax.experimental import pallas as pl
from jax.experimental.pallas import tpu as pltpu

H, W = 16, 16                        # spatial size of the encoder output
C_IN, C_EMBED, C_F1, C_F2, N_CLS = 24, 32, 64, 128, 10
N_PAD = 128                          # classifier output padded to a full lane tile
BLOCK_B = 64                         # max batch elements / grid step


def _round_up(n, m):
    return (n + m - 1) // m * m


def mynet_kernel(x_ref, we_ref, be_ref, w1_ref, b1_ref, w2_ref, b2_ref,
                 w3_ref, b3_ref, out_ref):
    bt = out_ref.shape[0]                 # batch elements in this tile
    n1 = x_ref.shape[0] // bt             # 64 first-pool windows / element
    n2 = n1 // 4                          # 16 second-pool windows / element
    c_e = be_ref.shape[1] // 4            # 32 embed channels
    c_1 = w1_ref.shape[1]                 # 64
    c_2 = w2_ref.shape[1]                 # 128

    # embed: Conv2d(24, 32, 1x1) applied to all 4 members of each first 2x2
    # pool window at once via the block-diagonal (96, 128) weight.
    h = jnp.dot(x_ref[...], we_ref[...], preferred_element_type=jnp.float32)
    h = (h + be_ref[...]).astype(jnp.bfloat16)                     # (BT*64, 128)

    # max_pool2d(2) #1: in-row max over the four 32-lane member groups.
    p = jnp.maximum(jnp.maximum(h[:, 0:c_e],       h[:, c_e:2 * c_e]),
                    jnp.maximum(h[:, 2 * c_e:3 * c_e], h[:, 3 * c_e:4 * c_e]))

    # final1: Conv2d(32, 64, 1x1)
    h = jnp.dot(p, w1_ref[...], preferred_element_type=jnp.float32)
    h = (h + b1_ref[...]).astype(jnp.bfloat16)                     # (BT*64, 64)

    # max_pool2d(2) #2: rows per element are ordered (member2, window2), so
    # the 4 members of each second-stage window sit at quarter row offsets.
    h = h.reshape(bt, n1, c_1)
    h = jnp.maximum(jnp.maximum(h[:, 0:n2],          h[:, n2:2 * n2]),
                    jnp.maximum(h[:, 2 * n2:3 * n2], h[:, 3 * n2:4 * n2]))  # (BT,16,64)

    # final2: Conv2d(64, 128, 1x1)
    h = jnp.dot(h.reshape(bt * n2, c_1), w2_ref[...],
                preferred_element_type=jnp.float32) + b2_ref[...]  # (BT*16, 128)

    # x.flatten(2).max(2): global spatial max per batch element
    g = jnp.max(h.reshape(bt, n2, c_2), axis=1)                    # (BT, 128)

    # final3: Linear(128, 10), zero-padded to 128 output lanes (lane-dense vst)
    out_ref[...] = jnp.dot(g.astype(jnp.bfloat16), w3_ref[...],
                           preferred_element_type=jnp.float32) + b3_ref[...]


def _pool_packed_rows(x_nchw):
    """NCHW -> (B, 64, 96): one row per (batch, first 2x2 pool window) with the
    4 window members' channels concatenated along lanes.  Per element the 64
    rows are ordered (second-pool member, second-pool window) so the second
    max-pool is a quarter-offset row max in the kernel.  Pure
    reshape/transpose (one XLA copy fused with the bf16 cast, no gather)."""
    b, c, h, w = x_nchw.shape
    assert h % 4 == 0 and w % 4 == 0, "spatial dims must be multiples of 4"
    # pixel (4*i2 + 2*di2 + di1, 4*j2 + 2*dj2 + dj1), channel cin  ->
    #   row  = (di2*2 + dj2) * (h//4)*(w//4) + i2*(w//4) + j2
    #   lane = (di1*2 + dj1) * c + cin
    x = x_nchw.reshape(b, c, h // 4, 2, 2, w // 4, 2, 2)  # (B,C,i2,di2,di1,j2,dj2,dj1)
    x = jnp.transpose(x, (0, 3, 6, 2, 5, 4, 7, 1))        # (B,di2,dj2,i2,j2,di1,dj1,C)
    return x.reshape(b, (h // 2) * (w // 2), 4 * c)


@jax.jit
def mynet_forward(x_nchw, params):
    we, be, w1, b1, w2, b2, w3, b3 = params
    b = x_nchw.shape[0]
    hh, ww = x_nchw.shape[2], x_nchw.shape[3]
    n1 = (hh // 2) * (ww // 2)                            # 64 first-pool windows

    # TODO(synk): the external `encoder` passed to MyNet is opaque; it is
    # treated as the identity here (its 24-channel output is the kernel input).
    xp = _pool_packed_rows(x_nchw).astype(jnp.bfloat16)   # (B, 64, 96)

    # Batch tile: multiple of 8, capped at BLOCK_B, and sized so realistic
    # batches get >= 2 grid steps (keeps both v7x TensorCores busy).
    bt = min(BLOCK_B, _round_up(-(-b // 2), 8))
    b_pad = _round_up(b, bt)
    if b_pad != b:
        xp = jnp.pad(xp, ((0, b_pad - b), (0, 0), (0, 0)))
    xp = xp.reshape(b_pad * n1, 4 * C_IN)                 # (B_pad*64, 96)

    # Weight prep: bf16 matmul operands; stage-1 weight/bias replicated
    # block-diagonally over the 4 pool-window members; classifier padded to 128.
    we_blk = jnp.kron(jnp.eye(4, dtype=jnp.float32), we).astype(jnp.bfloat16)  # (96,128)
    be_t = jnp.tile(be, (1, 4))                                                # (1,128)
    w1_b = w1.astype(jnp.bfloat16)
    w2_b = w2.astype(jnp.bfloat16)
    w3_b = jnp.zeros((C_F2, N_PAD), jnp.bfloat16).at[:, :N_CLS].set(
        w3.astype(jnp.bfloat16))
    b3_p = jnp.zeros((1, N_PAD), jnp.float32).at[:, :N_CLS].set(b3)

    grid = (b_pad // bt,)
    flops = 2 * b_pad * (n1 * (4 * C_IN) * (4 * C_EMBED)   # block-diag embed
                         + n1 * C_EMBED * C_F1
                         + (n1 // 4) * C_F1 * C_F2
                         + C_F2 * N_PAD)
    bytes_accessed = (b_pad * n1 * 128 * 2                 # input (96->128 lane-padded bf16)
                      + b_pad * N_PAD * 4                  # output
                      + 2 * (96 * 128 + C_EMBED * 128 + C_F1 * 128 + C_F2 * N_PAD)  # bf16 weights
                      + 4 * 4 * 8 * 128)                   # f32 biases (tile-padded)

    out = pl.pallas_call(
        mynet_kernel,
        out_shape=jax.ShapeDtypeStruct((b_pad, N_PAD), jnp.float32),
        grid_spec=pltpu.PrefetchScalarGridSpec(
            num_scalar_prefetch=0,
            grid=grid,
            in_specs=[
                pl.BlockSpec((bt * n1, 4 * C_IN), lambda i: (i, 0)),
                pl.BlockSpec((4 * C_IN, 4 * C_EMBED), lambda i: (0, 0)),
                pl.BlockSpec((1, 4 * C_EMBED), lambda i: (0, 0)),
                pl.BlockSpec((C_EMBED, C_F1), lambda i: (0, 0)),
                pl.BlockSpec((1, C_F1), lambda i: (0, 0)),
                pl.BlockSpec((C_F1, C_F2), lambda i: (0, 0)),
                pl.BlockSpec((1, C_F2), lambda i: (0, 0)),
                pl.BlockSpec((C_F2, N_PAD), lambda i: (0, 0)),
                pl.BlockSpec((1, N_PAD), lambda i: (0, 0)),
            ],
            out_specs=pl.BlockSpec((bt, N_PAD), lambda i: (i, 0)),
        ),
        compiler_params=pltpu.CompilerParams(
            dimension_semantics=("parallel",),
            vmem_limit_bytes=32 * 1024 * 1024),
        cost_estimate=pl.CostEstimate(flops=flops, transcendentals=0,
                                      bytes_accessed=bytes_accessed),
    )(xp, we_blk, be_t, w1_b, b1, w2_b, b2, w3_b, b3_p)
    return out[:b, :N_CLS]


def init_params(key):
    # PyTorch Conv2d 1x1 weights are (Cout, Cin, 1, 1); we build the
    # mathematically equivalent (Cin, Cout) matrices directly.
    ks = jax.random.split(key, 8)

    def dense(k, fan_in, shape):
        return jax.random.normal(k, shape, jnp.float32) / jnp.sqrt(fan_in)

    we = dense(ks[0], C_IN, (C_IN, C_EMBED))
    be = dense(ks[1], C_IN, (1, C_EMBED))
    w1 = dense(ks[2], C_EMBED, (C_EMBED, C_F1))
    b1 = dense(ks[3], C_EMBED, (1, C_F1))
    w2 = dense(ks[4], C_F1, (C_F1, C_F2))
    b2 = dense(ks[5], C_F1, (1, C_F2))
    w3 = dense(ks[6], C_F2, (C_F2, N_CLS))
    b3 = dense(ks[7], C_F2, (1, N_CLS))
    return (we, be, w1, b1, w2, b2, w3, b3)


def ref_forward(x_nchw, params):
    """Plain-JAX reference mirroring the PyTorch forward (NCHW semantics) at
    the kernel's precision: bf16 matmul operands, f32 accumulation, f32
    biases / pooling / global max."""
    we, be, w1, b1, w2, b2, w3, b3 = params

    def bf(t):
        return t.astype(jnp.bfloat16).astype(jnp.float32)

    x = jnp.transpose(x_nchw, (0, 2, 3, 1))          # NHWC

    def conv1x1(t, wm, bm):
        return jnp.einsum("bhwc,cd->bhwd", bf(t), bf(wm)) + bm[0]

    def pool(t):
        B_, H_, W_, C_ = t.shape
        return jnp.max(t.reshape(B_, H_ // 2, 2, W_ // 2, 2, C_), axis=(2, 4))

    h = pool(conv1x1(x, we, be))          # embed + max_pool2d(2)
    h = pool(conv1x1(h, w1, b1))          # final1 + max_pool2d(2)
    h = conv1x1(h, w2, b2)                # final2
    g = jnp.max(h, axis=(1, 2))           # flatten(2).max(2)
    return jnp.dot(bf(g), bf(w3)) + b3    # final3


if __name__ == "__main__":
    key = jax.random.PRNGKey(0)
    k_x, k_p = jax.random.split(key)
    params = init_params(k_p)
    x = jax.random.normal(k_x, (2, C_IN, H, W), jnp.float32)   # NCHW like PyTorch

    out = mynet_forward(x, params)
    out = jax.block_until_ready(out)

    ref = ref_forward(x, params)
    assert out.shape == (2, N_CLS), out.shape
    err = float(jnp.max(jnp.abs(out - ref)))
    if err > 1e-2:
        raise AssertionError(f"kernel/reference mismatch: max abs err = {err}")
    print("KERNEL_OK")
</pallas_src>

<mosaic_0001>
module attributes {stable_mosaic.version = 11 : i64} {
  func.func @mynet_kernel(%arg0: i32, %arg1: memref<512x96xbf16, #tpu.memory_space<vmem>>, %arg2: memref<96x128xbf16, #tpu.memory_space<vmem>>, %arg3: memref<1x128xf32, #tpu.memory_space<vmem>>, %arg4: memref<32x64xbf16, #tpu.memory_space<vmem>>, %arg5: memref<1x64xf32, #tpu.memory_space<vmem>>, %arg6: memref<64x128xbf16, #tpu.memory_space<vmem>>, %arg7: memref<1x128xf32, #tpu.memory_space<vmem>>, %arg8: memref<128x128xbf16, #tpu.memory_space<vmem>>, %arg9: memref<1x128xf32, #tpu.memory_space<vmem>>, %arg10: memref<8x128xf32, #tpu.memory_space<vmem>>) attributes {dimension_semantics = [#tpu.dimension_semantics<parallel>], iteration_bounds = array<i64: 1>, scalar_prefetch = 0 : i64, scratch_operands = 0 : i64, tpu.core_type = #tpu.core_type<tc>, window_params = [{transform_indices = @transform_0, window_bounds = array<i64: 512, 96>}, {pipeline_mode = #tpu.pipeline_mode<synchronous>, transform_indices = @transform_1, window_bounds = array<i64: 96, 128>}, {pipeline_mode = #tpu.pipeline_mode<synchronous>, transform_indices = @transform_2, window_bounds = array<i64: 1, 128>}, {pipeline_mode = #tpu.pipeline_mode<synchronous>, transform_indices = @transform_3, window_bounds = array<i64: 32, 64>}, {pipeline_mode = #tpu.pipeline_mode<synchronous>, transform_indices = @transform_4, window_bounds = array<i64: 1, 64>}, {pipeline_mode = #tpu.pipeline_mode<synchronous>, transform_indices = @transform_5, window_bounds = array<i64: 64, 128>}, {pipeline_mode = #tpu.pipeline_mode<synchronous>, transform_indices = @transform_6, window_bounds = array<i64: 1, 128>}, {pipeline_mode = #tpu.pipeline_mode<synchronous>, transform_indices = @transform_7, window_bounds = array<i64: 128, 128>}, {pipeline_mode = #tpu.pipeline_mode<synchronous>, transform_indices = @transform_8, window_bounds = array<i64: 1, 128>}, {transform_indices = @transform_9, window_bounds = array<i64: 8, 128>}]} {
    %c0 = arith.constant 0 : index
    %c0_0 = arith.constant 0 : index
    %0 = vector.load %arg1[%c0, %c0_0] : memref<512x96xbf16, #tpu.memory_space<vmem>>, vector<512x96xbf16>
    %c0_1 = arith.constant 0 : index
    %c0_2 = arith.constant 0 : index
    %1 = vector.load %arg2[%c0_1, %c0_2] : memref<96x128xbf16, #tpu.memory_space<vmem>>, vector<96x128xbf16>
    %cst = arith.constant dense<0.000000e+00> : vector<512x128xf32>
    %2 = tpu.matmul %0, %1, %cst {dimension_numbers = #tpu.dot_dimension_numbers<[1], [0], [0], [1], [0, 0, 1, 1], [], []>} : vector<512x96xbf16>, vector<96x128xbf16>, vector<512x128xf32> -> vector<512x128xf32>
    %c0_3 = arith.constant 0 : index
    %c0_4 = arith.constant 0 : index
    %3 = vector.load %arg3[%c0_3, %c0_4] : memref<1x128xf32, #tpu.memory_space<vmem>>, vector<1x128xf32>
    %4 = vector.broadcast %3 : vector<1x128xf32> to vector<512x128xf32>
    %5 = arith.addf %2, %4 : vector<512x128xf32>
    %6 = arith.truncf %5 : vector<512x128xf32> to vector<512x128xbf16>
    %7 = vector.extract_strided_slice %6 {offsets = [0, 0], sizes = [512, 32], strides = [1, 1]} : vector<512x128xbf16> to vector<512x32xbf16>
    %8 = vector.extract_strided_slice %6 {offsets = [0, 32], sizes = [512, 32], strides = [1, 1]} : vector<512x128xbf16> to vector<512x32xbf16>
    %9 = arith.maximumf %7, %8 : vector<512x32xbf16>
    %10 = vector.extract_strided_slice %6 {offsets = [0, 64], sizes = [512, 32], strides = [1, 1]} : vector<512x128xbf16> to vector<512x32xbf16>
    %11 = vector.extract_strided_slice %6 {offsets = [0, 96], sizes = [512, 32], strides = [1, 1]} : vector<512x128xbf16> to vector<512x32xbf16>
    %12 = arith.maximumf %10, %11 : vector<512x32xbf16>
    %13 = arith.maximumf %9, %12 : vector<512x32xbf16>
    %c0_5 = arith.constant 0 : index
    %c0_6 = arith.constant 0 : index
    %14 = vector.load %arg4[%c0_5, %c0_6] : memref<32x64xbf16, #tpu.memory_space<vmem>>, vector<32x64xbf16>
    %cst_7 = arith.constant dense<0.000000e+00> : vector<512x64xf32>
    %15 = tpu.matmul %13, %14, %cst_7 {dimension_numbers = #tpu.dot_dimension_numbers<[1], [0], [0], [1], [0, 0, 1, 1], [], []>} : vector<512x32xbf16>, vector<32x64xbf16>, vector<512x64xf32> -> vector<512x64xf32>
    %c0_8 = arith.constant 0 : index
    %c0_9 = arith.constant 0 : index
    %16 = vector.load %arg5[%c0_8, %c0_9] : memref<1x64xf32, #tpu.memory_space<vmem>>, vector<1x64xf32>
    %17 = vector.broadcast %16 : vector<1x64xf32> to vector<512x64xf32>
    %18 = arith.addf %15, %17 : vector<512x64xf32>
    %19 = arith.truncf %18 : vector<512x64xf32> to vector<512x64xbf16>
    %20 = vector.shape_cast %19 : vector<512x64xbf16> to vector<8x64x64xbf16>
    %21 = vector.extract_strided_slice %20 {offsets = [0, 0, 0], sizes = [8, 16, 64], strides = [1, 1, 1]} : vector<8x64x64xbf16> to vector<8x16x64xbf16>
    %22 = vector.extract_strided_slice %20 {offsets = [0, 16, 0], sizes = [8, 16, 64], strides = [1, 1, 1]} : vector<8x64x64xbf16> to vector<8x16x64xbf16>
    %23 = arith.maximumf %21, %22 : vector<8x16x64xbf16>
    %24 = vector.extract_strided_slice %20 {offsets = [0, 32, 0], sizes = [8, 16, 64], strides = [1, 1, 1]} : vector<8x64x64xbf16> to vector<8x16x64xbf16>
    %25 = vector.extract_strided_slice %20 {offsets = [0, 48, 0], sizes = [8, 16, 64], strides = [1, 1, 1]} : vector<8x64x64xbf16> to vector<8x16x64xbf16>
    %26 = arith.maximumf %24, %25 : vector<8x16x64xbf16>
    %27 = arith.maximumf %23, %26 : vector<8x16x64xbf16>
    %28 = vector.shape_cast %27 : vector<8x16x64xbf16> to vector<128x64xbf16>
    %c0_10 = arith.constant 0 : index
    %c0_11 = arith.constant 0 : index
    %29 = vector.load %arg6[%c0_10, %c0_11] : memref<64x128xbf16, #tpu.memory_space<vmem>>, vector<64x128xbf16>
    %cst_12 = arith.constant dense<0.000000e+00> : vector<128x128xf32>
    %30 = tpu.matmul %28, %29, %cst_12 {dimension_numbers = #tpu.dot_dimension_numbers<[1], [0], [0], [1], [0, 0, 1, 1], [], []>} : vector<128x64xbf16>, vector<64x128xbf16>, vector<128x128xf32> -> vector<128x128xf32>
    %c0_13 = arith.constant 0 : index
    %c0_14 = arith.constant 0 : index
    %31 = vector.load %arg7[%c0_13, %c0_14] : memref<1x128xf32, #tpu.memory_space<vmem>>, vector<1x128xf32>
    %32 = vector.broadcast %31 : vector<1x128xf32> to vector<128x128xf32>
    %33 = arith.addf %30, %32 : vector<128x128xf32>
    %34 = vector.shape_cast %33 : vector<128x128xf32> to vector<8x16x128xf32>
    %cst_15 = arith.constant dense<0xFF800000> : vector<8x128xf32>
    %35 = vector.multi_reduction <maximumf>, %34, %cst_15 [1] : vector<8x16x128xf32> to vector<8x128xf32>
    %36 = arith.truncf %35 : vector<8x128xf32> to vector<8x128xbf16>
    %c0_16 = arith.constant 0 : index
    %c0_17 = arith.constant 0 : index
    %37 = vector.load %arg8[%c0_16, %c0_17] : memref<128x128xbf16, #tpu.memory_space<vmem>>, vector<128x128xbf16>
    %cst_18 = arith.constant dense<0.000000e+00> : vector<8x128xf32>
    %38 = tpu.matmul %36, %37, %cst_18 {dimension_numbers = #tpu.dot_dimension_numbers<[1], [0], [0], [1], [0, 0, 1, 1], [], []>} : vector<8x128xbf16>, vector<128x128xbf16>, vector<8x128xf32> -> vector<8x128xf32>
    %c0_19 = arith.constant 0 : index
    %c0_20 = arith.constant 0 : index
    %39 = vector.load %arg9[%c0_19, %c0_20] : memref<1x128xf32, #tpu.memory_space<vmem>>, vector<1x128xf32>
    %40 = vector.broadcast %39 : vector<1x128xf32> to vector<8x128xf32>
    %41 = arith.addf %38, %40 : vector<8x128xf32>
    %c0_21 = arith.constant 0 : index
    %c0_22 = arith.constant 0 : index
    %42 = vector.load %arg10[%c0_21, %c0_22] : memref<8x128xf32, #tpu.memory_space<vmem>>, vector<8x128xf32>
    tpu.vector_store %arg10[%c0_21, %c0_22], %41 {strides = array<i32>} : memref<8x128xf32, #tpu.memory_space<vmem>>, vector<8x128xf32>,
    return
  }
  func.func @transform_0(%arg0: i32) -> (i32, i32) {
    %c0_i32 = arith.constant 0 : i32
    %c0_i32_0 = arith.constant 0 : i32
    return %arg0, %c0_i32 : i32, i32
  }
  func.func @transform_1(%arg0: i32) -> (i32, i32) {
    %c0_i32 = arith.constant 0 : i32
    %c0_i32_0 = arith.constant 0 : i32
    %c0_i32_1 = arith.constant 0 : i32
    return %c0_i32, %c0_i32_0 : i32, i32
  }
  func.func @transform_2(%arg0: i32) -> (i32, i32) {
    %c0_i32 = arith.constant 0 : i32
    %c0_i32_0 = arith.constant 0 : i32
    %c0_i32_1 = arith.constant 0 : i32
    return %c0_i32, %c0_i32_0 : i32, i32
  }
  func.func @transform_3(%arg0: i32) -> (i32, i32) {
    %c0_i32 = arith.constant 0 : i32
    %c0_i32_0 = arith.constant 0 : i32
    %c0_i32_1 = arith.constant 0 : i32
    return %c0_i32, %c0_i32_0 : i32, i32
  }
  func.func @transform_4(%arg0: i32) -> (i32, i32) {
    %c0_i32 = arith.constant 0 : i32
    %c0_i32_0 = arith.constant 0 : i32
    %c0_i32_1 = arith.constant 0 : i32
    return %c0_i32, %c0_i32_0 : i32, i32
  }
  func.func @transform_5(%arg0: i32) -> (i32, i32) {
    %c0_i32 = arith.constant 0 : i32
    %c0_i32_0 = arith.constant 0 : i32
    %c0_i32_1 = arith.constant 0 : i32
    return %c0_i32, %c0_i32_0 : i32, i32
  }
  func.func @transform_6(%arg0: i32) -> (i32, i32) {
    %c0_i32 = arith.constant 0 : i32
    %c0_i32_0 = arith.constant 0 : i32
    %c0_i32_1 = arith.constant 0 : i32
    return %c0_i32, %c0_i32_0 : i32, i32
  }
  func.func @transform_7(%arg0: i32) -> (i32, i32) {
    %c0_i32 = arith.constant 0 : i32
    %c0_i32_0 = arith.constant 0 : i32
    %c0_i32_1 = arith.constant 0 : i32
    return %c0_i32, %c0_i32_0 : i32, i32
  }
  func.func @transform_8(%arg0: i32) -> (i32, i32) {
    %c0_i32 = arith.constant 0 : i32
    %c0_i32_0 = arith.constant 0 : i32
    %c0_i32_1 = arith.constant 0 : i32
    return %c0_i32, %c0_i32_0 : i32, i32
  }
  func.func @transform_9(%arg0: i32) -> (i32, i32) {
    %c0_i32 = arith.constant 0 : i32
    %c0_i32_0 = arith.constant 0 : i32
    return %arg0, %c0_i32 : i32, i32
  }
}

</mosaic_0001>

<llo_original>
// kernel: mynet_forward.1
$region0: #{mynet_forward.1}
  #allocation0 [shape = 'u32[]', space=smem, size = 0x4, offset = 0x4, fixed_abs, tag = 'smem constant byte address 0x4 - core index']
  #allocation1 [shape = 'u32[144,128]{1,0:T(1,128)}', space=vmem, size = 0x12000, scoped, tag = 'internal scratch']
  %s0 = inlined_call_operand.vmem [shape: bf16[512,96], index: 0, kind: input, shape index: {}]
  %s1 = inlined_call_operand.vmem [shape: bf16[96,128], index: 1, kind: input, shape index: {}]
  %s2 = inlined_call_operand.vmem [shape: f32[1,128], index: 2, kind: input, shape index: {}]
  %s3 = inlined_call_operand.vmem [shape: bf16[32,64], index: 3, kind: input, shape index: {}]
  %s4 = inlined_call_operand.vmem [shape: f32[1,64], index: 4, kind: input, shape index: {}]
  %s5 = inlined_call_operand.vmem [shape: bf16[64,128], index: 5, kind: input, shape index: {}]
  %s6 = inlined_call_operand.vmem [shape: f32[1,128], index: 6, kind: input, shape index: {}]
  %s7 = inlined_call_operand.vmem [shape: bf16[128,128], index: 7, kind: input, shape index: {}]
  %s8 = inlined_call_operand.vmem [shape: f32[1,128], index: 8, kind: input, shape index: {}]
  %s9 = inlined_call_operand.vmem [shape: f32[8,128], index: 9, kind: output, shape index: {}]
  %s10 = sld [smem:[#allocation0]]
  $region46: #{mynet_forward.1} parent=0
    _
  %s12 = ssub.s32 1, %s10
  %s13 = scalar_select 0, %s12, %s10
  // Predicated region
  $region2: #{mynet_forward.1} parent=0 // pred_check
    _
  $region3: #{mynet_forward.1} parent=0 // pred_check_branch
    %15 = sbr.rel (0) target = $region5
  $region4: #{mynet_forward.1} parent=0 // pred_region
    _
  $region5: #{mynet_forward.1} parent=0 // pred_fallthru
    _
  // Predicated region
  $region6: #{mynet_forward.1} parent=0 // pred_check
    _
  $region7: #{mynet_forward.1} parent=0 // pred_check_branch
    %17 = sbr.rel (0) target = $region9
  $region8: #{mynet_forward.1} parent=0 // pred_region
    _
  $region9: #{mynet_forward.1} parent=0 // pred_fallthru
    _
  // Predicated region
  $region10: #{mynet_forward.1} parent=0 // pred_check
    _
  $region11: #{mynet_forward.1} parent=0 // pred_check_branch
    %19 = sbr.rel (0) target = $region13
  $region12: #{mynet_forward.1} parent=0 // pred_region
    _
  $region13: #{mynet_forward.1} parent=0 // pred_fallthru
    _
  // Predicated region
  $region14: #{mynet_forward.1} parent=0 // pred_check
    _
  $region15: #{mynet_forward.1} parent=0 // pred_check_branch
    %21 = sbr.rel (0) target = $region17
  $region16: #{mynet_forward.1} parent=0 // pred_region
    _
  $region17: #{mynet_forward.1} parent=0 // pred_fallthru
    _
  // Predicated region
  $region18: #{mynet_forward.1} parent=0 // pred_check
    _
  $region19: #{mynet_forward.1} parent=0 // pred_check_branch
    %23 = sbr.rel (0) target = $region21
  $region20: #{mynet_forward.1} parent=0 // pred_region
    _
  $region21: #{mynet_forward.1} parent=0 // pred_fallthru
    _
  // Predicated region
  $region22: #{mynet_forward.1} parent=0 // pred_check
    _
  $region23: #{mynet_forward.1} parent=0 // pred_check_branch
    %25 = sbr.rel (0) target = $region25
  $region24: #{mynet_forward.1} parent=0 // pred_region
    _
  $region25: #{mynet_forward.1} parent=0 // pred_fallthru
    _
  // Predicated region
  $region26: #{mynet_forward.1} parent=0 // pred_check
    _
  $region27: #{mynet_forward.1} parent=0 // pred_check_branch
    %27 = sbr.rel (0) target = $region29
  $region28: #{mynet_forward.1} parent=0 // pred_region
    _
  $region29: #{mynet_forward.1} parent=0 // pred_fallthru
    _
  // Predicated region
  $region30: #{mynet_forward.1} parent=0 // pred_check
    _
  $region31: #{mynet_forward.1} parent=0 // pred_check_branch
    %29 = sbr.rel (0) target = $region33
  $region32: #{mynet_forward.1} parent=0 // pred_region
    _
  $region33: #{mynet_forward.1} parent=0 // pred_fallthru
    _
  // Predicated region
  $region34: #{mynet_forward.1} parent=0 // pred_check
    _
  $region35: #{mynet_forward.1} parent=0 // pred_check_branch
    %31 = sbr.rel (0) target = $region37
  $region36: #{mynet_forward.1} parent=0 // pred_region
    _
  $region37: #{mynet_forward.1} parent=0 // pred_fallthru
    _
  %v33 = vld [vmem:[%s0] sm:$0xf]
  %v34 = vld [vmem:[%s0 + $0x4] sm:$0xf]
  %v35 = vld [vmem:[%s0 + $0x8] sm:$0xf]
  %v36 = vld [vmem:[%s0 + $0xc] sm:$0xf]
  %v37 = vld [vmem:[%s0 + $0x10] sm:$0xf]
  %v38 = vld [vmem:[%s0 + $0x14] sm:$0xf]
  %v39 = vld [vmem:[%s0 + $0x18] sm:$0xf]
  %v40 = vld [vmem:[%s0 + $0x1c] sm:$0xf]
  %v41 = vld [vmem:[%s0 + $0x20] sm:$0xf]
  %v42 = vld [vmem:[%s0 + $0x24] sm:$0xf]
  %v43 = vld [vmem:[%s0 + $0x28] sm:$0xf]
  %v44 = vld [vmem:[%s0 + $0x2c] sm:$0xf]
  %v45 = vld [vmem:[%s0 + $0x30] sm:$0xf]
  %v46 = vld [vmem:[%s0 + $0x34] sm:$0xf]
  %v47 = vld [vmem:[%s0 + $0x38] sm:$0xf]
  %v48 = vld [vmem:[%s0 + $0x3c] sm:$0xf]
  %v49 = vld [vmem:[%s0 + $0x40] sm:$0xf]
  %v50 = vld [vmem:[%s0 + $0x44] sm:$0xf]
  %v51 = vld [vmem:[%s0 + $0x48] sm:$0xf]
  %v52 = vld [vmem:[%s0 + $0x4c] sm:$0xf]
  %v53 = vld [vmem:[%s0 + $0x50] sm:$0xf]
  %v54 = vld [vmem:[%s0 + $0x54] sm:$0xf]
  %v55 = vld [vmem:[%s0 + $0x58] sm:$0xf]
  %v56 = vld [vmem:[%s0 + $0x5c] sm:$0xf]
  %v57 = vld [vmem:[%s0 + $0x60] sm:$0xf]
  %v58 = vld [vmem:[%s0 + $0x64] sm:$0xf]
  %v59 = vld [vmem:[%s0 + $0x68] sm:$0xf]
  %v60 = vld [vmem:[%s0 + $0x6c] sm:$0xf]
  %v61 = vld [vmem:[%s0 + $0x70] sm:$0xf]
  %v62 = vld [vmem:[%s0 + $0x74] sm:$0xf]
  %v63 = vld [vmem:[%s0 + $0x78] sm:$0xf]
  %v64 = vld [vmem:[%s0 + $0x7c] sm:$0xf]
  %v65 = vld [vmem:[%s0 + $0x80] sm:$0xf]
  %v66 = vld [vmem:[%s0 + $0x84] sm:$0xf]
  %v67 = vld [vmem:[%s0 + $0x88] sm:$0xf]
  %v68 = vld [vmem:[%s0 + $0x8c] sm:$0xf]
  %v69 = vld [vmem:[%s0 + $0x90] sm:$0xf]
  %v70 = vld [vmem:[%s0 + $0x94] sm:$0xf]
  %v71 = vld [vmem:[%s0 + $0x98] sm:$0xf]
  %v72 = vld [vmem:[%s0 + $0x9c] sm:$0xf]
  %v73 = vld [vmem:[%s0 + $0xa0] sm:$0xf]
  %v74 = vld [vmem:[%s0 + $0xa4] sm:$0xf]
  %v75 = vld [vmem:[%s0 + $0xa8] sm:$0xf]
  %v76 = vld [vmem:[%s0 + $0xac] sm:$0xf]
  %v77 = vld [vmem:[%s0 + $0xb0] sm:$0xf]
  %v78 = vld [vmem:[%s0 + $0xb4] sm:$0xf]
  %v79 = vld [vmem:[%s0 + $0xb8] sm:$0xf]
  %v80 = vld [vmem:[%s0 + $0xbc] sm:$0xf]
  %v81 = vld [vmem:[%s0 + $0xc0] sm:$0xf]
  %v82 = vld [vmem:[%s0 + $0xc4] sm:$0xf]
  %v83 = vld [vmem:[%s0 + $0xc8] sm:$0xf]
  %v84 = vld [vmem:[%s0 + $0xcc] sm:$0xf]
  %v85 = vld [vmem:[%s0 + $0xd0] sm:$0xf]
  %v86 = vld [vmem:[%s0 + $0xd4] sm:$0xf]
  %v87 = vld [vmem:[%s0 + $0xd8] sm:$0xf]
  %v88 = vld [vmem:[%s0 + $0xdc] sm:$0xf]
  %v89 = vld [vmem:[%s0 + $0xe0] sm:$0xf]
  %v90 = vld [vmem:[%s0 + $0xe4] sm:$0xf]
  %v91 = vld [vmem:[%s0 + $0xe8] sm:$0xf]
  %v92 = vld [vmem:[%s0 + $0xec] sm:$0xf]
  %v93 = vld [vmem:[%s0 + $0xf0] sm:$0xf]
  %v94 = vld [vmem:[%s0 + $0xf4] sm:$0xf]
  %v95 = vld [vmem:[%s0 + $0xf8] sm:$0xf]
  %v96 = vld [vmem:[%s0 + $0xfc] sm:$0xf]
  %v97 = vld [vmem:[%s1] sm:$0xf]
  %v98 = vld [vmem:[%s1 + $0x4] sm:$0xf]
  %v99 = vld [vmem:[%s1 + $0x8] sm:$0xf]
  %v100 = vld [vmem:[%s1 + $0xc] sm:$0xf]
  %v101 = vld [vmem:[%s1 + $0x10] sm:$0xf]
  %v102 = vld [vmem:[%s1 + $0x14] sm:$0xf]
  %v103 = vld [vmem:[%s1 + $0x18] sm:$0xf]
  %v104 = vld [vmem:[%s1 + $0x1c] sm:$0xf]
  %v105 = vld [vmem:[%s1 + $0x20] sm:$0xf]
  %v106 = vld [vmem:[%s1 + $0x24] sm:$0xf]
  %v107 = vld [vmem:[%s1 + $0x28] sm:$0xf]
  %v108 = vld [vmem:[%s1 + $0x2c] sm:$0xf]
  %v109 = vld [vmem:[%s2] sm:$0x1]
  %v111 = vlaneseq
  %v112 = vshrl.u32 %v111, 7
  %v113 = vsub.s32 0, %v112
  %v114 = vrot.slane %v109, %v113
  %v180 = vunpack.c.l.b16 %v33
  %v181 = vunpack.c.l.b16 %v34
  %v182 = vunpack.c.l.b16 %v35
  %v183 = vunpack.c.l.b16 %v36
  %v184 = vunpack.c.l.b16 %v37
  %v185 = vunpack.c.l.b16 %v38
  %v186 = vunpack.c.l.b16 %v39
  %v187 = vunpack.c.l.b16 %v40
  %v188 = vunpack.c.l.b16 %v41
  %v189 = vunpack.c.l.b16 %v42
  %v190 = vunpack.c.l.b16 %v43
  %v191 = vunpack.c.l.b16 %v44
  %v192 = vunpack.c.l.b16 %v45
  %v193 = vunpack.c.l.b16 %v46
  %v194 = vunpack.c.l.b16 %v47
  %v195 = vunpack.c.l.b16 %v48
  %v196 = vunpack.c.l.b16 %v49
  %v197 = vunpack.c.l.b16 %v50
  %v198 = vunpack.c.l.b16 %v51
  %v199 = vunpack.c.l.b16 %v52
  %v200 = vunpack.c.l.b16 %v53
  %v201 = vunpack.c.l.b16 %v54
  %v202 = vunpack.c.l.b16 %v55
  %v203 = vunpack.c.l.b16 %v56
  %v204 = vunpack.c.l.b16 %v57
  %v205 = vunpack.c.l.b16 %v58
  %v206 = vunpack.c.l.b16 %v59
  %v207 = vunpack.c.l.b16 %v60
  %v208 = vunpack.c.l.b16 %v61
  %v209 = vunpack.c.l.b16 %v62
  %v210 = vunpack.c.l.b16 %v63
  %v211 = vunpack.c.l.b16 %v64
  %v212 = vunpack.c.l.b16 %v65
  %v213 = vunpack.c.l.b16 %v66
  %v214 = vunpack.c.l.b16 %v67
  %v215 = vunpack.c.l.b16 %v68
  %v216 = vunpack.c.l.b16 %v69
  %v217 = vunpack.c.l.b16 %v70
  %v218 = vunpack.c.l.b16 %v71
  %v219 = vunpack.c.l.b16 %v72
  %v220 = vunpack.c.l.b16 %v73
  %v221 = vunpack.c.l.b16 %v74
  %v222 = vunpack.c.l.b16 %v75
  %v223 = vunpack.c.l.b16 %v76
  %v224 = vunpack.c.l.b16 %v77
  %v225 = vunpack.c.l.b16 %v78
  %v226 = vunpack.c.l.b16 %v79
  %v227 = vunpack.c.l.b16 %v80
  %v228 = vunpack.c.l.b16 %v81
  %v229 = vunpack.c.l.b16 %v82
  %v230 = vunpack.c.l.b16 %v83
  %v231 = vunpack.c.l.b16 %v84
  %v232 = vunpack.c.l.b16 %v85
  %v233 = vunpack.c.l.b16 %v86
  %v234 = vunpack.c.l.b16 %v87
  %v235 = vunpack.c.l.b16 %v88
  %v236 = vunpack.c.l.b16 %v89
  %v237 = vunpack.c.l.b16 %v90
  %v238 = vunpack.c.l.b16 %v91
  %v239 = vunpack.c.l.b16 %v92
  %v240 = vunpack.c.l.b16 %v93
  %v241 = vunpack.c.l.b16 %v94
  %v242 = vunpack.c.l.b16 %v95
  %v243 = vunpack.c.l.b16 %v96
  %v244 = vpack.c.b16 %v181, %v180
  %v245 = vpack.c.b16 %v183, %v182
  %v246 = vpack.c.b16 %v185, %v184
  %v247 = vpack.c.b16 %v187, %v186
  %v248 = vpack.c.b16 %v189, %v188
  %v249 = vpack.c.b16 %v191, %v190
  %v250 = vpack.c.b16 %v193, %v192
  %v251 = vpack.c.b16 %v195, %v194
  %v252 = vpack.c.b16 %v197, %v196
  %v253 = vpack.c.b16 %v199, %v198
  %v254 = vpack.c.b16 %v201, %v200
  %v255 = vpack.c.b16 %v203, %v202
  %v256 = vpack.c.b16 %v205, %v204
  %v257 = vpack.c.b16 %v207, %v206
  %v258 = vpack.c.b16 %v209, %v208
  %v259 = vpack.c.b16 %v211, %v210
  %v260 = vpack.c.b16 %v213, %v212
  %v261 = vpack.c.b16 %v215, %v214
  %v262 = vpack.c.b16 %v217, %v216
  %v263 = vpack.c.b16 %v219, %v218
  %v264 = vpack.c.b16 %v221, %v220
  %v265 = vpack.c.b16 %v223, %v222
  %v266 = vpack.c.b16 %v225, %v224
  %v267 = vpack.c.b16 %v227, %v226
  %v268 = vpack.c.b16 %v229, %v228
  %v269 = vpack.c.b16 %v231, %v230
  %v270 = vpack.c.b16 %v233, %v232
  %v271 = vpack.c.b16 %v235, %v234
  %v272 = vpack.c.b16 %v237, %v236
  %v273 = vpack.c.b16 %v239, %v238
  %v274 = vpack.c.b16 %v241, %v240
  %v275 = vpack.c.b16 %v243, %v242
  %v288 = vunpack.c.l.b16 %v97
  %v289 = vunpack.c.l.b16 %v98
  %v290 = vunpack.c.l.b16 %v99
  %v291 = vunpack.c.l.b16 %v100
  %v292 = vunpack.c.l.b16 %v101
  %v293 = vunpack.c.l.b16 %v102
  %v294 = vunpack.c.l.b16 %v103
  %v295 = vunpack.c.l.b16 %v104
  %v296 = vunpack.c.l.b16 %v105
  %v297 = vunpack.c.l.b16 %v106
  %v298 = vunpack.c.l.b16 %v107
  %v299 = vunpack.c.l.b16 %v108
  %v300 = vpack.c.b16 %v289, %v288
  %v301 = vpack.c.b16 %v291, %v290
  %v302 = vpack.c.b16 %v293, %v292
  %v303 = vpack.c.b16 %v295, %v294
  %v304 = vpack.c.b16 %v297, %v296
  %v305 = vpack.c.b16 %v299, %v298
  %vm312 = vcmask 785408
  %v314 = vsel %vm312, %v244, 0
  %v317 = vsel %vm312, %v245, 0
  %v320 = vsel %vm312, %v246, 0
  %v323 = vsel %vm312, %v247, 0
  %v326 = vsel %vm312, %v248, 0
  %v329 = vsel %vm312, %v249, 0
  %v332 = vsel %vm312, %v250, 0
  %v335 = vsel %vm312, %v251, 0
  %v338 = vsel %vm312, %v252, 0
  %v341 = vsel %vm312, %v253, 0
  %v344 = vsel %vm312, %v254, 0
  %v347 = vsel %vm312, %v255, 0
  %v350 = vsel %vm312, %v256, 0
  %v353 = vsel %vm312, %v257, 0
  %v356 = vsel %vm312, %v258, 0
  %v359 = vsel %vm312, %v259, 0
  %v362 = vsel %vm312, %v260, 0
  %v365 = vsel %vm312, %v261, 0
  %v368 = vsel %vm312, %v262, 0
  %v371 = vsel %vm312, %v263, 0
  %v374 = vsel %vm312, %v264, 0
  %v377 = vsel %vm312, %v265, 0
  %v380 = vsel %vm312, %v266, 0
  %v383 = vsel %vm312, %v267, 0
  %v386 = vsel %vm312, %v268, 0
  %v389 = vsel %vm312, %v269, 0
  %v392 = vsel %vm312, %v270, 0
  %v395 = vsel %vm312, %v271, 0
  %v398 = vsel %vm312, %v272, 0
  %v401 = vsel %vm312, %v273, 0
  %v404 = vsel %vm312, %v274, 0
  %v407 = vsel %vm312, %v275, 0
  %409 = vmatprep.subr.bf16.mxu0 0
  %410 = vmatpush1.bf16.msra.mxu0 0
  %411 = vmatprep.subr.bf16.mxu0 0
  %412 = vmatpush1.bf16.msra.mxu0 0
  %413 = vmatprep.subr.bf16.mxu0 0
  %414 = vmatpush1.bf16.msra.mxu0 %v305
  %415 = vmatprep.subr.bf16.mxu0 0
  %416 = vmatpush1.bf16.msra.mxu0 %v304
  %417 = vmatprep.subr.bf16.mxu0 0
  %418 = vmatpush1.bf16.msra.mxu0 %v303
  %419 = vmatprep.subr.bf16.mxu0 0
  %420 = vmatpush1.bf16.msra.mxu0 %v302
  %421 = vmatprep.subr.bf16.mxu0 0
  %422 = vmatpush1.bf16.msra.mxu0 %v301
  %423 = vmatprep.subr.bf16.mxu0 0
  %424 = vmatpush1.bf16.msra.mxu0 %v300
  %425 = vmatprep.subr.bf16.mxu0 0
  %426 = vmatpush2.bf16.msra.mxu0 0
  %427 = vmatprep.subr.bf16.mxu0 0
  %428 = vmatpush2.bf16.msra.mxu0 0
  %429 = vmatprep.subr.bf16.mxu0 0
  %430 = vmatpush2.bf16.msra.mxu0 0
  %431 = vmatprep.subr.bf16.mxu0 0
  %432 = vmatpush2.bf16.msra.mxu0 0
  %433 = vmatprep.subr.bf16.mxu0 0
  %434 = vmatpush2.bf16.msra.mxu0 0
  %435 = vmatprep.subr.bf16.mxu0 0
  %436 = vmatpush2.bf16.msra.mxu0 0
  %437 = vmatprep.subr.bf16.mxu0 0
  %438 = vmatpush2.bf16.msra.mxu0 0
  %439 = vmatprep.subr.bf16.mxu0 0
  %440 = vmatpush2.bf16.msra.mxu0 0
  %441 = vmatprep.mubr.bf16.mxu0 0
  %442 = vmatmul.mubr.bf16.gmra.mxu0 %v314
  %v443 = vpop.f32.mrf.mxu0
  %v444 = vadd.f32 %v114, %v443
  %v445 = vpop.f32.mrf.mxu0
  %v446 = vpop.f32.mrf.mxu0
  %v447 = vadd.f32 %v114, %v446
  %v448 = vpop.f32.mrf.mxu0
  %449 = vmatprep.mubr.bf16.mxu0 0
  %450 = vmatmul.mubr.bf16.gmra.mxu0 %v317
  %v451 = vpop.f32.mrf.mxu0
  %v452 = vadd.f32 %v114, %v451
  %v453 = vpop.f32.mrf.mxu0
  %v454 = vpop.f32.mrf.mxu0
  %v455 = vadd.f32 %v114, %v454
  %v456 = vpop.f32.mrf.mxu0
  %457 = vmatprep.mubr.bf16.mxu0 0
  %458 = vmatmul.mubr.bf16.gmra.mxu0 %v320
  %v459 = vpop.f32.mrf.mxu0
  %v460 = vadd.f32 %v114, %v459
  %v461 = vpop.f32.mrf.mxu0
  %v462 = vpop.f32.mrf.mxu0
  %v463 = vadd.f32 %v114, %v462
  %v464 = vpop.f32.mrf.mxu0
  %465 = vmatprep.mubr.bf16.mxu0 0
  %466 = vmatmul.mubr.bf16.gmra.mxu0 %v323
  %v467 = vpop.f32.mrf.mxu0
  %v468 = vadd.f32 %v114, %v467
  %v469 = vpop.f32.mrf.mxu0
  %v470 = vpop.f32.mrf.mxu0
  %v471 = vadd.f32 %v114, %v470
  %v472 = vpop.f32.mrf.mxu0
  %473 = vmatprep.mubr.bf16.mxu0 0
  %474 = vmatmul.mubr.bf16.gmra.mxu0 %v326
  %v475 = vpop.f32.mrf.mxu0
  %v476 = vadd.f32 %v114, %v475
  %v477 = vpop.f32.mrf.mxu0
  %v478 = vpop.f32.mrf.mxu0
  %v479 = vadd.f32 %v114, %v478
  %v480 = vpop.f32.mrf.mxu0
  %481 = vmatprep.mubr.bf16.mxu0 0
  %482 = vmatmul.mubr.bf16.gmra.mxu0 %v329
  %v483 = vpop.f32.mrf.mxu0
  %v484 = vadd.f32 %v114, %v483
  %v485 = vpop.f32.mrf.mxu0
  %v486 = vpop.f32.mrf.mxu0
  %v487 = vadd.f32 %v114, %v486
  %v488 = vpop.f32.mrf.mxu0
  %489 = vmatprep.mubr.bf16.mxu0 0
  %490 = vmatmul.mubr.bf16.gmra.mxu0 %v332
  %v491 = vpop.f32.mrf.mxu0
  %v492 = vadd.f32 %v114, %v491
  %v493 = vpop.f32.mrf.mxu0
  %v494 = vpop.f32.mrf.mxu0
  %v495 = vadd.f32 %v114, %v494
  %v496 = vpop.f32.mrf.mxu0
  %497 = vmatprep.mubr.bf16.mxu0 0
  %498 = vmatmul.mubr.bf16.gmra.mxu0 %v335
  %v499 = vpop.f32.mrf.mxu0
  %v500 = vadd.f32 %v114, %v499
  %v501 = vpop.f32.mrf.mxu0
  %v502 = vpop.f32.mrf.mxu0
  %v503 = vadd.f32 %v114, %v502
  %v504 = vpop.f32.mrf.mxu0
  %505 = vmatprep.mubr.bf16.mxu0 0
  %506 = vmatmul.mubr.bf16.gmra.mxu0 %v338
  %v507 = vpop.f32.mrf.mxu0
  %v508 = vadd.f32 %v114, %v507
  %v509 = vpop.f32.mrf.mxu0
  %v510 = vpop.f32.mrf.mxu0
  %v511 = vadd.f32 %v114, %v510
  %v512 = vpop.f32.mrf.mxu0
  %513 = vmatprep.mubr.bf16.mxu0 0
  %514 = vmatmul.mubr.bf16.gmra.mxu0 %v341
  %v515 = vpop.f32.mrf.mxu0
  %v516 = vadd.f32 %v114, %v515
  %v517 = vpop.f32.mrf.mxu0
  %v518 = vpop.f32.mrf.mxu0
  %v519 = vadd.f32 %v114, %v518
  %v520 = vpop.f32.mrf.mxu0
  %521 = vmatprep.mubr.bf16.mxu0 0
  %522 = vmatmul.mubr.bf16.gmra.mxu0 %v344
  %v523 = vpop.f32.mrf.mxu0
  %v524 = vadd.f32 %v114, %v523
  %v525 = vpop.f32.mrf.mxu0
  %v526 = vpop.f32.mrf.mxu0
  %v527 = vadd.f32 %v114, %v526
  %v528 = vpop.f32.mrf.mxu0
  %529 = vmatprep.mubr.bf16.mxu0 0
  %530 = vmatmul.mubr.bf16.gmra.mxu0 %v347
  %v531 = vpop.f32.mrf.mxu0
  %v532 = vadd.f32 %v114, %v531
  %v533 = vpop.f32.mrf.mxu0
  %v534 = vpop.f32.mrf.mxu0
  %v535 = vadd.f32 %v114, %v534
  %v536 = vpop.f32.mrf.mxu0
  %537 = vmatprep.mubr.bf16.mxu0 0
  %538 = vmatmul.mubr.bf16.gmra.mxu0 %v350
  %v539 = vpop.f32.mrf.mxu0
  %v540 = vadd.f32 %v114, %v539
  %v541 = vpop.f32.mrf.mxu0
  %v542 = vpop.f32.mrf.mxu0
  %v543 = vadd.f32 %v114, %v542
  %v544 = vpop.f32.mrf.mxu0
  %545 = vmatprep.mubr.bf16.mxu0 0
  %546 = vmatmul.mubr.bf16.gmra.mxu0 %v353
  %v547 = vpop.f32.mrf.mxu0
  %v548 = vadd.f32 %v114, %v547
  %v549 = vpop.f32.mrf.mxu0
  %v550 = vpop.f32.mrf.mxu0
  %v551 = vadd.f32 %v114, %v550
  %v552 = vpop.f32.mrf.mxu0
  %553 = vmatprep.mubr.bf16.mxu0 0
  %554 = vmatmul.mubr.bf16.gmra.mxu0 %v356
  %v555 = vpop.f32.mrf.mxu0
  %v556 = vadd.f32 %v114, %v555
  %v557 = vpop.f32.mrf.mxu0
  %v558 = vpop.f32.mrf.mxu0
  %v559 = vadd.f32 %v114, %v558
  %v560 = vpop.f32.mrf.mxu0
  %561 = vmatprep.mubr.bf16.mxu0 0
  %562 = vmatmul.mubr.bf16.gmra.mxu0 %v359
  %v563 = vpop.f32.mrf.mxu0
  %v564 = vadd.f32 %v114, %v563
  %v565 = vpop.f32.mrf.mxu0
  %v566 = vpop.f32.mrf.mxu0
  %v567 = vadd.f32 %v114, %v566
  %v568 = vpop.f32.mrf.mxu0
  %569 = vmatprep.mubr.bf16.mxu0 0
  %570 = vmatmul.mubr.bf16.gmra.mxu0 %v362
  %v571 = vpop.f32.mrf.mxu0
  %v572 = vadd.f32 %v114, %v571
  %v573 = vpop.f32.mrf.mxu0
  %v574 = vpop.f32.mrf.mxu0
  %v575 = vadd.f32 %v114, %v574
  %v576 = vpop.f32.mrf.mxu0
  %577 = vmatprep.mubr.bf16.mxu0 0
  %578 = vmatmul.mubr.bf16.gmra.mxu0 %v365
  %v579 = vpop.f32.mrf.mxu0
  %v580 = vadd.f32 %v114, %v579
  %v581 = vpop.f32.mrf.mxu0
  %v582 = vpop.f32.mrf.mxu0
  %v583 = vadd.f32 %v114, %v582
  %v584 = vpop.f32.mrf.mxu0
  %585 = vmatprep.mubr.bf16.mxu0 0
  %586 = vmatmul.mubr.bf16.gmra.mxu0 %v368
  %v587 = vpop.f32.mrf.mxu0
  %v588 = vadd.f32 %v114, %v587
  %v589 = vpop.f32.mrf.mxu0
  %v590 = vpop.f32.mrf.mxu0
  %v591 = vadd.f32 %v114, %v590
  %v592 = vpop.f32.mrf.mxu0
  %593 = vmatprep.mubr.bf16.mxu0 0
  %594 = vmatmul.mubr.bf16.gmra.mxu0 %v371
  %v595 = vpop.f32.mrf.mxu0
  %v596 = vadd.f32 %v114, %v595
  %v597 = vpop.f32.mrf.mxu0
  %v598 = vpop.f32.mrf.mxu0
  %v599 = vadd.f32 %v114, %v598
  %v600 = vpop.f32.mrf.mxu0
  %601 = vmatprep.mubr.bf16.mxu0 0
  %602 = vmatmul.mubr.bf16.gmra.mxu0 %v374
  %v603 = vpop.f32.mrf.mxu0
  %v604 = vadd.f32 %v114, %v603
  %v605 = vpop.f32.mrf.mxu0
  %v606 = vpop.f32.mrf.mxu0
  %v607 = vadd.f32 %v114, %v606
  %v608 = vpop.f32.mrf.mxu0
  %609 = vmatprep.mubr.bf16.mxu0 0
  %610 = vmatmul.mubr.bf16.gmra.mxu0 %v377
  %v611 = vpop.f32.mrf.mxu0
  %v612 = vadd.f32 %v114, %v611
  %v613 = vpop.f32.mrf.mxu0
  %v614 = vpop.f32.mrf.mxu0
  %v615 = vadd.f32 %v114, %v614
  %v616 = vpop.f32.mrf.mxu0
  %617 = vmatprep.mubr.bf16.mxu0 0
  %618 = vmatmul.mubr.bf16.gmra.mxu0 %v380
  %v619 = vpop.f32.mrf.mxu0
  %v620 = vadd.f32 %v114, %v619
  %v621 = vpop.f32.mrf.mxu0
  %v622 = vpop.f32.mrf.mxu0
  %v623 = vadd.f32 %v114, %v622
  %v624 = vpop.f32.mrf.mxu0
  %625 = vmatprep.mubr.bf16.mxu0 0
  %626 = vmatmul.mubr.bf16.gmra.mxu0 %v383
  %v627 = vpop.f32.mrf.mxu0
  %v628 = vadd.f32 %v114, %v627
  %v629 = vpop.f32.mrf.mxu0
  %v630 = vpop.f32.mrf.mxu0
  %v631 = vadd.f32 %v114, %v630
  %v632 = vpop.f32.mrf.mxu0
  %633 = vmatprep.mubr.bf16.mxu0 0
  %634 = vmatmul.mubr.bf16.gmra.mxu0 %v386
  %v635 = vpop.f32.mrf.mxu0
  %v636 = vadd.f32 %v114, %v635
  %v637 = vpop.f32.mrf.mxu0
  %v638 = vpop.f32.mrf.mxu0
  %v639 = vadd.f32 %v114, %v638
  %v640 = vpop.f32.mrf.mxu0
  %641 = vmatprep.mubr.bf16.mxu0 0
  %642 = vmatmul.mubr.bf16.gmra.mxu0 %v389
  %v643 = vpop.f32.mrf.mxu0
  %v644 = vadd.f32 %v114, %v643
  %v645 = vpop.f32.mrf.mxu0
  %v646 = vpop.f32.mrf.mxu0
  %v647 = vadd.f32 %v114, %v646
  %v648 = vpop.f32.mrf.mxu0
  %649 = vmatprep.mubr.bf16.mxu0 0
  %650 = vmatmul.mubr.bf16.gmra.mxu0 %v392
  %v651 = vpop.f32.mrf.mxu0
  %v652 = vadd.f32 %v114, %v651
  %v653 = vpop.f32.mrf.mxu0
  %v654 = vpop.f32.mrf.mxu0
  %v655 = vadd.f32 %v114, %v654
  %v656 = vpop.f32.mrf.mxu0
  %657 = vmatprep.mubr.bf16.mxu0 0
  %658 = vmatmul.mubr.bf16.gmra.mxu0 %v395
  %v659 = vpop.f32.mrf.mxu0
  %v660 = vadd.f32 %v114, %v659
  %v661 = vpop.f32.mrf.mxu0
  %v662 = vpop.f32.mrf.mxu0
  %v663 = vadd.f32 %v114, %v662
  %v664 = vpop.f32.mrf.mxu0
  %665 = vmatprep.mubr.bf16.mxu0 0
  %666 = vmatmul.mubr.bf16.gmra.mxu0 %v398
  %v667 = vpop.f32.mrf.mxu0
  %v668 = vadd.f32 %v114, %v667
  %v669 = vpop.f32.mrf.mxu0
  %v670 = vpop.f32.mrf.mxu0
  %v671 = vadd.f32 %v114, %v670
  %v672 = vpop.f32.mrf.mxu0
  %673 = vmatprep.mubr.bf16.mxu0 0
  %674 = vmatmul.mubr.bf16.gmra.mxu0 %v401
  %v675 = vpop.f32.mrf.mxu0
  %v676 = vadd.f32 %v114, %v675
  %v677 = vpop.f32.mrf.mxu0
  %v678 = vpop.f32.mrf.mxu0
  %v679 = vadd.f32 %v114, %v678
  %v680 = vpop.f32.mrf.mxu0
  %681 = vmatprep.mubr.bf16.mxu0 0
  %682 = vmatmul.mubr.bf16.gmra.mxu0 %v404
  %v683 = vpop.f32.mrf.mxu0
  %v684 = vadd.f32 %v114, %v683
  %v685 = vpop.f32.mrf.mxu0
  %v686 = vpop.f32.mrf.mxu0
  %v687 = vadd.f32 %v114, %v686
  %v688 = vpop.f32.mrf.mxu0
  %689 = vmatprep.mubr.bf16.mxu0 0
  %690 = vmatmul.mubr.bf16.gmra.mxu0 %v407
  %v691 = vpop.f32.mrf.mxu0
  %v692 = vadd.f32 %v114, %v691
  %v693 = vpop.f32.mrf.mxu0
  %v694 = vpop.f32.mrf.mxu0
  %v695 = vadd.f32 %v114, %v694
  %v696 = vpop.f32.mrf.mxu0
  %697 = vdwg.mxu0
  %v698 = vpack.c.bf16 %v447, %v444
  %v699 = vpack.c.bf16 %v455, %v452
  %v700 = vpack.c.bf16 %v463, %v460
  %v701 = vpack.c.bf16 %v471, %v468
  %v702 = vpack.c.bf16 %v479, %v476
  %v703 = vpack.c.bf16 %v487, %v484
  %v704 = vpack.c.bf16 %v495, %v492
  %v705 = vpack.c.bf16 %v503, %v500
  %v706 = vpack.c.bf16 %v511, %v508
  %v707 = vpack.c.bf16 %v519, %v516
  %v708 = vpack.c.bf16 %v527, %v524
  %v709 = vpack.c.bf16 %v535, %v532
  %v710 = vpack.c.bf16 %v543, %v540
  %v711 = vpack.c.bf16 %v551, %v548
  %v712 = vpack.c.bf16 %v559, %v556
  %v713 = vpack.c.bf16 %v567, %v564
  %v714 = vpack.c.bf16 %v575, %v572
  %v715 = vpack.c.bf16 %v583, %v580
  %v716 = vpack.c.bf16 %v591, %v588
  %v717 = vpack.c.bf16 %v599, %v596
  %v718 = vpack.c.bf16 %v607, %v604
  %v719 = vpack.c.bf16 %v615, %v612
  %v720 = vpack.c.bf16 %v623, %v620
  %v721 = vpack.c.bf16 %v631, %v628
  %v722 = vpack.c.bf16 %v639, %v636
  %v723 = vpack.c.bf16 %v647, %v644
  %v724 = vpack.c.bf16 %v655, %v652
  %v725 = vpack.c.bf16 %v663, %v660
  %v726 = vpack.c.bf16 %v671, %v668
  %v727 = vpack.c.bf16 %v679, %v676
  %v728 = vpack.c.bf16 %v687, %v684
  %v729 = vpack.c.bf16 %v695, %v692
  %762 = vrot.lane.b32.xlu0 %v698, 96
  %v763 = vpop.permute.xlu0 %762
  %764 = vrot.lane.b32.xlu0 %v699, 96
  %v765 = vpop.permute.xlu0 %764
  %766 = vrot.lane.b32.xlu0 %v700, 96
  %v767 = vpop.permute.xlu0 %766
  %768 = vrot.lane.b32.xlu0 %v701, 96
  %v769 = vpop.permute.xlu0 %768
  %770 = vrot.lane.b32.xlu0 %v702, 96
  %v771 = vpop.permute.xlu0 %770
  %772 = vrot.lane.b32.xlu0 %v703, 96
  %v773 = vpop.permute.xlu0 %772
  %774 = vrot.lane.b32.xlu0 %v704, 96
  %v775 = vpop.permute.xlu0 %774
  %776 = vrot.lane.b32.xlu0 %v705, 96
  %v777 = vpop.permute.xlu0 %776
  %778 = vrot.lane.b32.xlu0 %v706, 96
  %v779 = vpop.permute.xlu0 %778
  %780 = vrot.lane.b32.xlu0 %v707, 96
  %v781 = vpop.permute.xlu0 %780
  %782 = vrot.lane.b32.xlu0 %v708, 96
  %v783 = vpop.permute.xlu0 %782
  %784 = vrot.lane.b32.xlu0 %v709, 96
  %v785 = vpop.permute.xlu0 %784
  %786 = vrot.lane.b32.xlu0 %v710, 96
  %v787 = vpop.permute.xlu0 %786
  %788 = vrot.lane.b32.xlu0 %v711, 96
  %v789 = vpop.permute.xlu0 %788
  %790 = vrot.lane.b32.xlu0 %v712, 96
  %v791 = vpop.permute.xlu0 %790
  %792 = vrot.lane.b32.xlu0 %v713, 96
  %v793 = vpop.permute.xlu0 %792
  %794 = vrot.lane.b32.xlu0 %v714, 96
  %v795 = vpop.permute.xlu0 %794
  %796 = vrot.lane.b32.xlu0 %v715, 96
  %v797 = vpop.permute.xlu0 %796
  %798 = vrot.lane.b32.xlu0 %v716, 96
  %v799 = vpop.permute.xlu0 %798
  %800 = vrot.lane.b32.xlu0 %v717, 96
  %v801 = vpop.permute.xlu0 %800
  %802 = vrot.lane.b32.xlu0 %v718, 96
  %v803 = vpop.permute.xlu0 %802
  %804 = vrot.lane.b32.xlu0 %v719, 96
  %v805 = vpop.permute.xlu0 %804
  %806 = vrot.lane.b32.xlu0 %v720, 96
  %v807 = vpop.permute.xlu0 %806
  %808 = vrot.lane.b32.xlu0 %v721, 96
  %v809 = vpop.permute.xlu0 %808
  %810 = vrot.lane.b32.xlu0 %v722, 96
  %v811 = vpop.permute.xlu0 %810
  %812 = vrot.lane.b32.xlu0 %v723, 96
  %v813 = vpop.permute.xlu0 %812
  %814 = vrot.lane.b32.xlu0 %v724, 96
  %v815 = vpop.permute.xlu0 %814
  %816 = vrot.lane.b32.xlu0 %v725, 96
  %v817 = vpop.permute.xlu0 %816
  %818 = vrot.lane.b32.xlu0 %v726, 96
  %v819 = vpop.permute.xlu0 %818
  %820 = vrot.lane.b32.xlu0 %v727, 96
  %v821 = vpop.permute.xlu0 %820
  %822 = vrot.lane.b32.xlu0 %v728, 96
  %v823 = vpop.permute.xlu0 %822
  %824 = vrot.lane.b32.xlu0 %v729, 96
  %v825 = vpop.permute.xlu0 %824
  %v858 = vmax.bf16 %v698, %v763
  %v859 = vmax.bf16 %v699, %v765
  %v860 = vmax.bf16 %v700, %v767
  %v861 = vmax.bf16 %v701, %v769
  %v862 = vmax.bf16 %v702, %v771
  %v863 = vmax.bf16 %v703, %v773
  %v864 = vmax.bf16 %v704, %v775
  %v865 = vmax.bf16 %v705, %v777
  %v866 = vmax.bf16 %v706, %v779
  %v867 = vmax.bf16 %v707, %v781
  %v868 = vmax.bf16 %v708, %v783
  %v869 = vmax.bf16 %v709, %v785
  %v870 = vmax.bf16 %v710, %v787
  %v871 = vmax.bf16 %v711, %v789
  %v872 = vmax.bf16 %v712, %v791
  %v873 = vmax.bf16 %v713, %v793
  %v874 = vmax.bf16 %v714, %v795
  %v875 = vmax.bf16 %v715, %v797
  %v876 = vmax.bf16 %v716, %v799
  %v877 = vmax.bf16 %v717, %v801
  %v878 = vmax.bf16 %v718, %v803
  %v879 = vmax.bf16 %v719, %v805
  %v880 = vmax.bf16 %v720, %v807
  %v881 = vmax.bf16 %v721, %v809
  %v882 = vmax.bf16 %v722, %v811
  %v883 = vmax.bf16 %v723, %v813
  %v884 = vmax.bf16 %v724, %v815
  %v885 = vmax.bf16 %v725, %v817
  %v886 = vmax.bf16 %v726, %v819
  %v887 = vmax.bf16 %v727, %v821
  %v888 = vmax.bf16 %v728, %v823
  %v889 = vmax.bf16 %v729, %v825
  %922 = vrot.lane.b32.xlu0 %v858, 64
  %v923 = vpop.permute.xlu0 %922
  %924 = vrot.lane.b32.xlu0 %v859, 64
  %v925 = vpop.permute.xlu0 %924
  %926 = vrot.lane.b32.xlu0 %v860, 64
  %v927 = vpop.permute.xlu0 %926
  %928 = vrot.lane.b32.xlu0 %v861, 64
  %v929 = vpop.permute.xlu0 %928
  %930 = vrot.lane.b32.xlu0 %v862, 64
  %v931 = vpop.permute.xlu0 %930
  %932 = vrot.lane.b32.xlu0 %v863, 64
  %v933 = vpop.permute.xlu0 %932
  %934 = vrot.lane.b32.xlu0 %v864, 64
  %v935 = vpop.permute.xlu0 %934
  %936 = vrot.lane.b32.xlu0 %v865, 64
  %v937 = vpop.permute.xlu0 %936
  %938 = vrot.lane.b32.xlu0 %v866, 64
  %v939 = vpop.permute.xlu0 %938
  %940 = vrot.lane.b32.xlu0 %v867, 64
  %v941 = vpop.permute.xlu0 %940
  %942 = vrot.lane.b32.xlu0 %v868, 64
  %v943 = vpop.permute.xlu0 %942
  %944 = vrot.lane.b32.xlu0 %v869, 64
  %v945 = vpop.permute.xlu0 %944
  %946 = vrot.lane.b32.xlu0 %v870, 64
  %v947 = vpop.permute.xlu0 %946
  %948 = vrot.lane.b32.xlu0 %v871, 64
  %v949 = vpop.permute.xlu0 %948
  %950 = vrot.lane.b32.xlu0 %v872, 64
  %v951 = vpop.permute.xlu0 %950
  %952 = vrot.lane.b32.xlu0 %v873, 64
  %v953 = vpop.permute.xlu0 %952
  %954 = vrot.lane.b32.xlu0 %v874, 64
  %v955 = vpop.permute.xlu0 %954
  %956 = vrot.lane.b32.xlu0 %v875, 64
  %v957 = vpop.permute.xlu0 %956
  %958 = vrot.lane.b32.xlu0 %v876, 64
  %v959 = vpop.permute.xlu0 %958
  %960 = vrot.lane.b32.xlu0 %v877, 64
  %v961 = vpop.permute.xlu0 %960
  %962 = vrot.lane.b32.xlu0 %v878, 64
  %v963 = vpop.permute.xlu0 %962
  %964 = vrot.lane.b32.xlu0 %v879, 64
  %v965 = vpop.permute.xlu0 %964
  %966 = vrot.lane.b32.xlu0 %v880, 64
  %v967 = vpop.permute.xlu0 %966
  %968 = vrot.lane.b32.xlu0 %v881, 64
  %v969 = vpop.permute.xlu0 %968
  %970 = vrot.lane.b32.xlu0 %v882, 64
  %v971 = vpop.permute.xlu0 %970
  %972 = vrot.lane.b32.xlu0 %v883, 64
  %v973 = vpop.permute.xlu0 %972
  %974 = vrot.lane.b32.xlu0 %v884, 64
  %v975 = vpop.permute.xlu0 %974
  %976 = vrot.lane.b32.xlu0 %v885, 64
  %v977 = vpop.permute.xlu0 %976
  %978 = vrot.lane.b32.xlu0 %v886, 64
  %v979 = vpop.permute.xlu0 %978
  %980 = vrot.lane.b32.xlu0 %v887, 64
  %v981 = vpop.permute.xlu0 %980
  %982 = vrot.lane.b32.xlu0 %v888, 64
  %v983 = vpop.permute.xlu0 %982
  %984 = vrot.lane.b32.xlu0 %v889, 64
  %v985 = vpop.permute.xlu0 %984
  %v1018 = vmax.bf16 %v858, %v923
  %v1019 = vmax.bf16 %v859, %v925
  %v1020 = vmax.bf16 %v860, %v927
  %v1021 = vmax.bf16 %v861, %v929
  %v1022 = vmax.bf16 %v862, %v931
  %v1023 = vmax.bf16 %v863, %v933
  %v1024 = vmax.bf16 %v864, %v935
  %v1025 = vmax.bf16 %v865, %v937
  %v1026 = vmax.bf16 %v866, %v939
  %v1027 = vmax.bf16 %v867, %v941
  %v1028 = vmax.bf16 %v868, %v943
  %v1029 = vmax.bf16 %v869, %v945
  %v1030 = vmax.bf16 %v870, %v947
  %v1031 = vmax.bf16 %v871, %v949
  %v1032 = vmax.bf16 %v872, %v951
  %v1033 = vmax.bf16 %v873, %v953
  %v1034 = vmax.bf16 %v874, %v955
  %v1035 = vmax.bf16 %v875, %v957
  %v1036 = vmax.bf16 %v876, %v959
  %v1037 = vmax.bf16 %v877, %v961
  %v1038 = vmax.bf16 %v878, %v963
  %v1039 = vmax.bf16 %v879, %v965
  %v1040 = vmax.bf16 %v880, %v967
  %v1041 = vmax.bf16 %v881, %v969
  %v1042 = vmax.bf16 %v882, %v971
  %v1043 = vmax.bf16 %v883, %v973
  %v1044 = vmax.bf16 %v884, %v975
  %v1045 = vmax.bf16 %v885, %v977
  %v1046 = vmax.bf16 %v886, %v979
  %v1047 = vmax.bf16 %v887, %v981
  %v1048 = vmax.bf16 %v888, %v983
  %v1049 = vmax.bf16 %v889, %v985
  %v1050 = vld [vmem:[%s3] sm:$0xf]
  %v1051 = vld [vmem:[%s3 + $0x4] sm:$0xf]
  %v1052 = vld [vmem:[%s3 + $0x8] sm:$0xf]
  %v1053 = vld [vmem:[%s3 + $0xc] sm:$0xf]
  %v1054 = vld [vmem:[%s4] sm:$0x1]
  %v1056 = vlaneseq
  %v1057 = vshrl.u32 %v1056, 7
  %v1058 = vsub.s32 0, %v1057
  %v1059 = vrot.slane %v1054, %v1058
  %v1065 = vunpack.c.l.b16 %v1050
  %v1066 = vunpack.c.l.b16 %v1051
  %v1067 = vunpack.c.l.b16 %v1052
  %v1068 = vunpack.c.l.b16 %v1053
  %v1069 = vpack.c.b16 %v1066, %v1065
  %v1070 = vpack.c.b16 %v1068, %v1067
  %vm1073 = vcmask 261120
  %v1075 = vsel %vm1073, %v1018, 0
  %v1078 = vsel %vm1073, %v1019, 0
  %v1081 = vsel %vm1073, %v1020, 0
  %v1084 = vsel %vm1073, %v1021, 0
  %v1087 = vsel %vm1073, %v1022, 0
  %v1090 = vsel %vm1073, %v1023, 0
  %v1093 = vsel %vm1073, %v1024, 0
  %v1096 = vsel %vm1073, %v1025, 0
  %v1099 = vsel %vm1073, %v1026, 0
  %v1102 = vsel %vm1073, %v1027, 0
  %v1105 = vsel %vm1073, %v1028, 0
  %v1108 = vsel %vm1073, %v1029, 0
  %v1111 = vsel %vm1073, %v1030, 0
  %v1114 = vsel %vm1073, %v1031, 0
  %v1117 = vsel %vm1073, %v1032, 0
  %v1120 = vsel %vm1073, %v1033, 0
  %v1123 = vsel %vm1073, %v1034, 0
  %v1126 = vsel %vm1073, %v1035, 0
  %v1129 = vsel %vm1073, %v1036, 0
  %v1132 = vsel %vm1073, %v1037, 0
  %v1135 = vsel %vm1073, %v1038, 0
  %v1138 = vsel %vm1073, %v1039, 0
  %v1141 = vsel %vm1073, %v1040, 0
  %v1144 = vsel %vm1073, %v1041, 0
  %v1147 = vsel %vm1073, %v1042, 0
  %v1150 = vsel %vm1073, %v1043, 0
  %v1153 = vsel %vm1073, %v1044, 0
  %v1156 = vsel %vm1073, %v1045, 0
  %v1159 = vsel %vm1073, %v1046, 0
  %v1162 = vsel %vm1073, %v1047, 0
  %v1165 = vsel %vm1073, %v1048, 0
  %v1168 = vsel %vm1073, %v1049, 0
  %1170 = vmatprep.subr.bf16.mxu0 0
  %1171 = vmatpush1.bf16.msra.mxu0 0
  %1172 = vmatprep.subr.bf16.mxu0 0
  %1173 = vmatpush1.bf16.msra.mxu0 0
  %1174 = vmatprep.subr.bf16.mxu0 0
  %1175 = vmatpush1.bf16.msra.mxu0 0
  %1176 = vmatprep.subr.bf16.mxu0 0
  %1177 = vmatpush1.bf16.msra.mxu0 0
  %1178 = vmatprep.subr.bf16.mxu0 0
  %1179 = vmatpush1.bf16.msra.mxu0 0
  %1180 = vmatprep.subr.bf16.mxu0 0
  %1181 = vmatpush1.bf16.msra.mxu0 0
  %1182 = vmatprep.subr.bf16.mxu0 0
  %1183 = vmatpush1.bf16.msra.mxu0 %v1070
  %1184 = vmatprep.subr.bf16.mxu0 0
  %1185 = vmatpush1.bf16.msra.mxu0 %v1069
  %1186 = vmatprep.subr.bf16.mxu0 0
  %1187 = vmatpush2.bf16.msra.mxu0 0
  %1188 = vmatprep.subr.bf16.mxu0 0
  %1189 = vmatpush2.bf16.msra.mxu0 0
  %1190 = vmatprep.subr.bf16.mxu0 0
  %1191 = vmatpush2.bf16.msra.mxu0 0
  %1192 = vmatprep.subr.bf16.mxu0 0
  %1193 = vmatpush2.bf16.msra.mxu0 0
  %1194 = vmatprep.subr.bf16.mxu0 0
  %1195 = vmatpush2.bf16.msra.mxu0 0
  %1196 = vmatprep.subr.bf16.mxu0 0
  %1197 = vmatpush2.bf16.msra.mxu0 0
  %1198 = vmatprep.subr.bf16.mxu0 0
  %1199 = vmatpush2.bf16.msra.mxu0 0
  %1200 = vmatprep.subr.bf16.mxu0 0
  %1201 = vmatpush2.bf16.msra.mxu0 0
  %1202 = vmatprep.mubr.bf16.mxu0 0
  %1203 = vmatmul.mubr.bf16.gmra.mxu0 %v1075
  %v1204 = vpop.f32.mrf.mxu0
  %v1205 = vadd.f32 %v1059, %v1204
  %v1206 = vpop.f32.mrf.mxu0
  %v1207 = vpop.f32.mrf.mxu0
  %v1208 = vadd.f32 %v1059, %v1207
  %v1209 = vpop.f32.mrf.mxu0
  %1210 = vmatprep.mubr.bf16.mxu0 0
  %1211 = vmatmul.mubr.bf16.gmra.mxu0 %v1078
  %v1212 = vpop.f32.mrf.mxu0
  %v1213 = vadd.f32 %v1059, %v1212
  %v1214 = vpop.f32.mrf.mxu0
  %v1215 = vpop.f32.mrf.mxu0
  %v1216 = vadd.f32 %v1059, %v1215
  %v1217 = vpop.f32.mrf.mxu0
  %1218 = vmatprep.mubr.bf16.mxu0 0
  %1219 = vmatmul.mubr.bf16.gmra.mxu0 %v1081
  %v1220 = vpop.f32.mrf.mxu0
  %v1221 = vadd.f32 %v1059, %v1220
  %v1222 = vpop.f32.mrf.mxu0
  %v1223 = vpop.f32.mrf.mxu0
  %v1224 = vadd.f32 %v1059, %v1223
  %v1225 = vpop.f32.mrf.mxu0
  %1226 = vmatprep.mubr.bf16.mxu0 0
  %1227 = vmatmul.mubr.bf16.gmra.mxu0 %v1084
  %v1228 = vpop.f32.mrf.mxu0
  %v1229 = vadd.f32 %v1059, %v1228
  %v1230 = vpop.f32.mrf.mxu0
  %v1231 = vpop.f32.mrf.mxu0
  %v1232 = vadd.f32 %v1059, %v1231
  %v1233 = vpop.f32.mrf.mxu0
  %1234 = vmatprep.mubr.bf16.mxu0 0
  %1235 = vmatmul.mubr.bf16.gmra.mxu0 %v1087
  %v1236 = vpop.f32.mrf.mxu0
  %v1237 = vadd.f32 %v1059, %v1236
  %v1238 = vpop.f32.mrf.mxu0
  %v1239 = vpop.f32.mrf.mxu0
  %v1240 = vadd.f32 %v1059, %v1239
  %v1241 = vpop.f32.mrf.mxu0
  %1242 = vmatprep.mubr.bf16.mxu0 0
  %1243 = vmatmul.mubr.bf16.gmra.mxu0 %v1090
  %v1244 = vpop.f32.mrf.mxu0
  %v1245 = vadd.f32 %v1059, %v1244
  %v1246 = vpop.f32.mrf.mxu0
  %v1247 = vpop.f32.mrf.mxu0
  %v1248 = vadd.f32 %v1059, %v1247
  %v1249 = vpop.f32.mrf.mxu0
  %1250 = vmatprep.mubr.bf16.mxu0 0
  %1251 = vmatmul.mubr.bf16.gmra.mxu0 %v1093
  %v1252 = vpop.f32.mrf.mxu0
  %v1253 = vadd.f32 %v1059, %v1252
  %v1254 = vpop.f32.mrf.mxu0
  %v1255 = vpop.f32.mrf.mxu0
  %v1256 = vadd.f32 %v1059, %v1255
  %v1257 = vpop.f32.mrf.mxu0
  %1258 = vmatprep.mubr.bf16.mxu0 0
  %1259 = vmatmul.mubr.bf16.gmra.mxu0 %v1096
  %v1260 = vpop.f32.mrf.mxu0
  %v1261 = vadd.f32 %v1059, %v1260
  %v1262 = vpop.f32.mrf.mxu0
  %v1263 = vpop.f32.mrf.mxu0
  %v1264 = vadd.f32 %v1059, %v1263
  %v1265 = vpop.f32.mrf.mxu0
  %1266 = vmatprep.mubr.bf16.mxu0 0
  %1267 = vmatmul.mubr.bf16.gmra.mxu0 %v1099
  %v1268 = vpop.f32.mrf.mxu0
  %v1269 = vadd.f32 %v1059, %v1268
  %v1270 = vpop.f32.mrf.mxu0
  %v1271 = vpop.f32.mrf.mxu0
  %v1272 = vadd.f32 %v1059, %v1271
  %v1273 = vpop.f32.mrf.mxu0
  %1274 = vmatprep.mubr.bf16.mxu0 0
  %1275 = vmatmul.mubr.bf16.gmra.mxu0 %v1102
  %v1276 = vpop.f32.mrf.mxu0
  %v1277 = vadd.f32 %v1059, %v1276
  %v1278 = vpop.f32.mrf.mxu0
  %v1279 = vpop.f32.mrf.mxu0
  %v1280 = vadd.f32 %v1059, %v1279
  %v1281 = vpop.f32.mrf.mxu0
  %1282 = vmatprep.mubr.bf16.mxu0 0
  %1283 = vmatmul.mubr.bf16.gmra.mxu0 %v1105
  %v1284 = vpop.f32.mrf.mxu0
  %v1285 = vadd.f32 %v1059, %v1284
  %v1286 = vpop.f32.mrf.mxu0
  %v1287 = vpop.f32.mrf.mxu0
  %v1288 = vadd.f32 %v1059, %v1287
  %v1289 = vpop.f32.mrf.mxu0
  %1290 = vmatprep.mubr.bf16.mxu0 0
  %1291 = vmatmul.mubr.bf16.gmra.mxu0 %v1108
  %v1292 = vpop.f32.mrf.mxu0
  %v1293 = vadd.f32 %v1059, %v1292
  %v1294 = vpop.f32.mrf.mxu0
  %v1295 = vpop.f32.mrf.mxu0
  %v1296 = vadd.f32 %v1059, %v1295
  %v1297 = vpop.f32.mrf.mxu0
  %1298 = vmatprep.mubr.bf16.mxu0 0
  %1299 = vmatmul.mubr.bf16.gmra.mxu0 %v1111
  %v1300 = vpop.f32.mrf.mxu0
  %v1301 = vadd.f32 %v1059, %v1300
  %v1302 = vpop.f32.mrf.mxu0
  %v1303 = vpop.f32.mrf.mxu0
  %v1304 = vadd.f32 %v1059, %v1303
  %v1305 = vpop.f32.mrf.mxu0
  %1306 = vmatprep.mubr.bf16.mxu0 0
  %1307 = vmatmul.mubr.bf16.gmra.mxu0 %v1114
  %v1308 = vpop.f32.mrf.mxu0
  %v1309 = vadd.f32 %v1059, %v1308
  %v1310 = vpop.f32.mrf.mxu0
  %v1311 = vpop.f32.mrf.mxu0
  %v1312 = vadd.f32 %v1059, %v1311
  %v1313 = vpop.f32.mrf.mxu0
  %1314 = vmatprep.mubr.bf16.mxu0 0
  %1315 = vmatmul.mubr.bf16.gmra.mxu0 %v1117
  %v1316 = vpop.f32.mrf.mxu0
  %v1317 = vadd.f32 %v1059, %v1316
  %v1318 = vpop.f32.mrf.mxu0
  %v1319 = vpop.f32.mrf.mxu0
  %v1320 = vadd.f32 %v1059, %v1319
  %v1321 = vpop.f32.mrf.mxu0
  %1322 = vmatprep.mubr.bf16.mxu0 0
  %1323 = vmatmul.mubr.bf16.gmra.mxu0 %v1120
  %v1324 = vpop.f32.mrf.mxu0
  %v1325 = vadd.f32 %v1059, %v1324
  %v1326 = vpop.f32.mrf.mxu0
  %v1327 = vpop.f32.mrf.mxu0
  %v1328 = vadd.f32 %v1059, %v1327
  %v1329 = vpop.f32.mrf.mxu0
  %1330 = vmatprep.mubr.bf16.mxu0 0
  %1331 = vmatmul.mubr.bf16.gmra.mxu0 %v1123
  %v1332 = vpop.f32.mrf.mxu0
  %v1333 = vadd.f32 %v1059, %v1332
  %v1334 = vpop.f32.mrf.mxu0
  %v1335 = vpop.f32.mrf.mxu0
  %v1336 = vadd.f32 %v1059, %v1335
  %v1337 = vpop.f32.mrf.mxu0
  %1338 = vmatprep.mubr.bf16.mxu0 0
  %1339 = vmatmul.mubr.bf16.gmra.mxu0 %v1126
  %v1340 = vpop.f32.mrf.mxu0
  %v1341 = vadd.f32 %v1059, %v1340
  %v1342 = vpop.f32.mrf.mxu0
  %v1343 = vpop.f32.mrf.mxu0
  %v1344 = vadd.f32 %v1059, %v1343
  %v1345 = vpop.f32.mrf.mxu0
  %1346 = vmatprep.mubr.bf16.mxu0 0
  %1347 = vmatmul.mubr.bf16.gmra.mxu0 %v1129
  %v1348 = vpop.f32.mrf.mxu0
  %v1349 = vadd.f32 %v1059, %v1348
  %v1350 = vpop.f32.mrf.mxu0
  %v1351 = vpop.f32.mrf.mxu0
  %v1352 = vadd.f32 %v1059, %v1351
  %v1353 = vpop.f32.mrf.mxu0
  %1354 = vmatprep.mubr.bf16.mxu0 0
  %1355 = vmatmul.mubr.bf16.gmra.mxu0 %v1132
  %v1356 = vpop.f32.mrf.mxu0
  %v1357 = vadd.f32 %v1059, %v1356
  %v1358 = vpop.f32.mrf.mxu0
  %v1359 = vpop.f32.mrf.mxu0
  %v1360 = vadd.f32 %v1059, %v1359
  %v1361 = vpop.f32.mrf.mxu0
  %1362 = vmatprep.mubr.bf16.mxu0 0
  %1363 = vmatmul.mubr.bf16.gmra.mxu0 %v1135
  %v1364 = vpop.f32.mrf.mxu0
  %v1365 = vadd.f32 %v1059, %v1364
  %v1366 = vpop.f32.mrf.mxu0
  %v1367 = vpop.f32.mrf.mxu0
  %v1368 = vadd.f32 %v1059, %v1367
  %v1369 = vpop.f32.mrf.mxu0
  %1370 = vmatprep.mubr.bf16.mxu0 0
  %1371 = vmatmul.mubr.bf16.gmra.mxu0 %v1138
  %v1372 = vpop.f32.mrf.mxu0
  %v1373 = vadd.f32 %v1059, %v1372
  %v1374 = vpop.f32.mrf.mxu0
  %v1375 = vpop.f32.mrf.mxu0
  %v1376 = vadd.f32 %v1059, %v1375
  %v1377 = vpop.f32.mrf.mxu0
  %1378 = vmatprep.mubr.bf16.mxu0 0
  %1379 = vmatmul.mubr.bf16.gmra.mxu0 %v1141
  %v1380 = vpop.f32.mrf.mxu0
  %v1381 = vadd.f32 %v1059, %v1380
  %v1382 = vpop.f32.mrf.mxu0
  %v1383 = vpop.f32.mrf.mxu0
  %v1384 = vadd.f32 %v1059, %v1383
  %v1385 = vpop.f32.mrf.mxu0
  %1386 = vmatprep.mubr.bf16.mxu0 0
  %1387 = vmatmul.mubr.bf16.gmra.mxu0 %v1144
  %v1388 = vpop.f32.mrf.mxu0
  %v1389 = vadd.f32 %v1059, %v1388
  %v1390 = vpop.f32.mrf.mxu0
  %v1391 = vpop.f32.mrf.mxu0
  %v1392 = vadd.f32 %v1059, %v1391
  %v1393 = vpop.f32.mrf.mxu0
  %1394 = vmatprep.mubr.bf16.mxu0 0
  %1395 = vmatmul.mubr.bf16.gmra.mxu0 %v1147
  %v1396 = vpop.f32.mrf.mxu0
  %v1397 = vadd.f32 %v1059, %v1396
  %v1398 = vpop.f32.mrf.mxu0
  %v1399 = vpop.f32.mrf.mxu0
  %v1400 = vadd.f32 %v1059, %v1399
  %v1401 = vpop.f32.mrf.mxu0
  %1402 = vmatprep.mubr.bf16.mxu0 0
  %1403 = vmatmul.mubr.bf16.gmra.mxu0 %v1150
  %v1404 = vpop.f32.mrf.mxu0
  %v1405 = vadd.f32 %v1059, %v1404
  %v1406 = vpop.f32.mrf.mxu0
  %v1407 = vpop.f32.mrf.mxu0
  %v1408 = vadd.f32 %v1059, %v1407
  %v1409 = vpop.f32.mrf.mxu0
  %1410 = vmatprep.mubr.bf16.mxu0 0
  %1411 = vmatmul.mubr.bf16.gmra.mxu0 %v1153
  %v1412 = vpop.f32.mrf.mxu0
  %v1413 = vadd.f32 %v1059, %v1412
  %v1414 = vpop.f32.mrf.mxu0
  %v1415 = vpop.f32.mrf.mxu0
  %v1416 = vadd.f32 %v1059, %v1415
  %v1417 = vpop.f32.mrf.mxu0
  %1418 = vmatprep.mubr.bf16.mxu0 0
  %1419 = vmatmul.mubr.bf16.gmra.mxu0 %v1156
  %v1420 = vpop.f32.mrf.mxu0
  %v1421 = vadd.f32 %v1059, %v1420
  %v1422 = vpop.f32.mrf.mxu0
  %v1423 = vpop.f32.mrf.mxu0
  %v1424 = vadd.f32 %v1059, %v1423
  %v1425 = vpop.f32.mrf.mxu0
  %1426 = vmatprep.mubr.bf16.mxu0 0
  %1427 = vmatmul.mubr.bf16.gmra.mxu0 %v1159
  %v1428 = vpop.f32.mrf.mxu0
  %v1429 = vadd.f32 %v1059, %v1428
  %v1430 = vpop.f32.mrf.mxu0
  %v1431 = vpop.f32.mrf.mxu0
  %v1432 = vadd.f32 %v1059, %v1431
  %v1433 = vpop.f32.mrf.mxu0
  %1434 = vmatprep.mubr.bf16.mxu0 0
  %1435 = vmatmul.mubr.bf16.gmra.mxu0 %v1162
  %v1436 = vpop.f32.mrf.mxu0
  %v1437 = vadd.f32 %v1059, %v1436
  %v1438 = vpop.f32.mrf.mxu0
  %v1439 = vpop.f32.mrf.mxu0
  %v1440 = vadd.f32 %v1059, %v1439
  %v1441 = vpop.f32.mrf.mxu0
  %1442 = vmatprep.mubr.bf16.mxu0 0
  %1443 = vmatmul.mubr.bf16.gmra.mxu0 %v1165
  %v1444 = vpop.f32.mrf.mxu0
  %v1445 = vadd.f32 %v1059, %v1444
  %v1446 = vpop.f32.mrf.mxu0
  %v1447 = vpop.f32.mrf.mxu0
  %v1448 = vadd.f32 %v1059, %v1447
  %v1449 = vpop.f32.mrf.mxu0
  %1450 = vmatprep.mubr.bf16.mxu0 0
  %1451 = vmatmul.mubr.bf16.gmra.mxu0 %v1168
  %v1452 = vpop.f32.mrf.mxu0
  %v1453 = vadd.f32 %v1059, %v1452
  %v1454 = vpop.f32.mrf.mxu0
  %v1455 = vpop.f32.mrf.mxu0
  %v1456 = vadd.f32 %v1059, %v1455
  %v1457 = vpop.f32.mrf.mxu0
  %1458 = vdwg.mxu0
  %v1459 = vpack.c.bf16 %v1208, %v1205
  %v1460 = vpack.c.bf16 %v1216, %v1213
  %v1461 = vpack.c.bf16 %v1224, %v1221
  %v1462 = vpack.c.bf16 %v1232, %v1229
  %v1463 = vpack.c.bf16 %v1240, %v1237
  %v1464 = vpack.c.bf16 %v1248, %v1245
  %v1465 = vpack.c.bf16 %v1256, %v1253
  %v1466 = vpack.c.bf16 %v1264, %v1261
  %v1467 = vpack.c.bf16 %v1272, %v1269
  %v1468 = vpack.c.bf16 %v1280, %v1277
  %v1469 = vpack.c.bf16 %v1288, %v1285
  %v1470 = vpack.c.bf16 %v1296, %v1293
  %v1471 = vpack.c.bf16 %v1304, %v1301
  %v1472 = vpack.c.bf16 %v1312, %v1309
  %v1473 = vpack.c.bf16 %v1320, %v1317
  %v1474 = vpack.c.bf16 %v1328, %v1325
  %v1475 = vpack.c.bf16 %v1336, %v1333
  %v1476 = vpack.c.bf16 %v1344, %v1341
  %v1477 = vpack.c.bf16 %v1352, %v1349
  %v1478 = vpack.c.bf16 %v1360, %v1357
  %v1479 = vpack.c.bf16 %v1368, %v1365
  %v1480 = vpack.c.bf16 %v1376, %v1373
  %v1481 = vpack.c.bf16 %v1384, %v1381
  %v1482 = vpack.c.bf16 %v1392, %v1389
  %v1483 = vpack.c.bf16 %v1400, %v1397
  %v1484 = vpack.c.bf16 %v1408, %v1405
  %v1485 = vpack.c.bf16 %v1416, %v1413
  %v1486 = vpack.c.bf16 %v1424, %v1421
  %v1487 = vpack.c.bf16 %v1432, %v1429
  %v1488 = vpack.c.bf16 %v1440, %v1437
  %v1489 = vpack.c.bf16 %v1448, %v1445
  %v1490 = vpack.c.bf16 %v1456, %v1453
  %v1491 = vmax.bf16 %v1459, %v1460
  %v1492 = vmax.bf16 %v1463, %v1464
  %v1493 = vmax.bf16 %v1467, %v1468
  %v1494 = vmax.bf16 %v1471, %v1472
  %v1495 = vmax.bf16 %v1475, %v1476
  %v1496 = vmax.bf16 %v1479, %v1480
  %v1497 = vmax.bf16 %v1483, %v1484
  %v1498 = vmax.bf16 %v1487, %v1488
  %v1499 = vmax.bf16 %v1461, %v1462
  %v1500 = vmax.bf16 %v1465, %v1466
  %v1501 = vmax.bf16 %v1469, %v1470
  %v1502 = vmax.bf16 %v1473, %v1474
  %v1503 = vmax.bf16 %v1477, %v1478
  %v1504 = vmax.bf16 %v1481, %v1482
  %v1505 = vmax.bf16 %v1485, %v1486
  %v1506 = vmax.bf16 %v1489, %v1490
  %v1507 = vmax.bf16 %v1491, %v1499
  %v1508 = vmax.bf16 %v1492, %v1500
  %v1509 = vmax.bf16 %v1493, %v1501
  %v1510 = vmax.bf16 %v1494, %v1502
  %v1511 = vmax.bf16 %v1495, %v1503
  %v1512 = vmax.bf16 %v1496, %v1504
  %v1513 = vmax.bf16 %v1497, %v1505
  %v1514 = vmax.bf16 %v1498, %v1506
  %v1515 = vld [vmem:[%s5] sm:$0xf]
  %v1516 = vld [vmem:[%s5 + $0x4] sm:$0xf]
  %v1517 = vld [vmem:[%s5 + $0x8] sm:$0xf]
  %v1518 = vld [vmem:[%s5 + $0xc] sm:$0xf]
  %v1519 = vld [vmem:[%s5 + $0x10] sm:$0xf]
  %v1520 = vld [vmem:[%s5 + $0x14] sm:$0xf]
  %v1521 = vld [vmem:[%s5 + $0x18] sm:$0xf]
  %v1522 = vld [vmem:[%s5 + $0x1c] sm:$0xf]
  %v1523 = vld [vmem:[%s6] sm:$0x1]
  %v1525 = vlaneseq
  %v1526 = vshrl.u32 %v1525, 7
  %v1527 = vsub.s32 0, %v1526
  %v1528 = vrot.slane %v1523, %v1527
  %v1538 = vunpack.c.l.b16 %v1515
  %v1539 = vunpack.c.l.b16 %v1516
  %v1540 = vunpack.c.l.b16 %v1517
  %v1541 = vunpack.c.l.b16 %v1518
  %v1542 = vunpack.c.l.b16 %v1519
  %v1543 = vunpack.c.l.b16 %v1520
  %v1544 = vunpack.c.l.b16 %v1521
  %v1545 = vunpack.c.l.b16 %v1522
  %v1546 = vpack.c.b16 %v1539, %v1538
  %v1547 = vpack.c.b16 %v1541, %v1540
  %v1548 = vpack.c.b16 %v1543, %v1542
  %v1549 = vpack.c.b16 %v1545, %v1544
  %vm1554 = vcmask 523264
  %v1556 = vsel %vm1554, %v1507, 0
  %v1559 = vsel %vm1554, %v1508, 0
  %v1562 = vsel %vm1554, %v1509, 0
  %v1565 = vsel %vm1554, %v1510, 0
  %v1568 = vsel %vm1554, %v1511, 0
  %v1571 = vsel %vm1554, %v1512, 0
  %v1574 = vsel %vm1554, %v1513, 0
  %v1577 = vsel %vm1554, %v1514, 0
  %1579 = vmatprep.subr.bf16.mxu0 0
  %1580 = vmatpush1.bf16.msra.mxu0 0
  %1581 = vmatprep.subr.bf16.mxu0 0
  %1582 = vmatpush1.bf16.msra.mxu0 0
  %1583 = vmatprep.subr.bf16.mxu0 0
  %1584 = vmatpush1.bf16.msra.mxu0 0
  %1585 = vmatprep.subr.bf16.mxu0 0
  %1586 = vmatpush1.bf16.msra.mxu0 0
  %1587 = vmatprep.subr.bf16.mxu0 0
  %1588 = vmatpush1.bf16.msra.mxu0 %v1549
  %1589 = vmatprep.subr.bf16.mxu0 0
  %1590 = vmatpush1.bf16.msra.mxu0 %v1548
  %1591 = vmatprep.subr.bf16.mxu0 0
  %1592 = vmatpush1.bf16.msra.mxu0 %v1547
  %1593 = vmatprep.subr.bf16.mxu0 0
  %1594 = vmatpush1.bf16.msra.mxu0 %v1546
  %1595 = vmatprep.subr.bf16.mxu0 0
  %1596 = vmatpush2.bf16.msra.mxu0 0
  %1597 = vmatprep.subr.bf16.mxu0 0
  %1598 = vmatpush2.bf16.msra.mxu0 0
  %1599 = vmatprep.subr.bf16.mxu0 0
  %1600 = vmatpush2.bf16.msra.mxu0 0
  %1601 = vmatprep.subr.bf16.mxu0 0
  %1602 = vmatpush2.bf16.msra.mxu0 0
  %1603 = vmatprep.subr.bf16.mxu0 0
  %1604 = vmatpush2.bf16.msra.mxu0 0
  %1605 = vmatprep.subr.bf16.mxu0 0
  %1606 = vmatpush2.bf16.msra.mxu0 0
  %1607 = vmatprep.subr.bf16.mxu0 0
  %1608 = vmatpush2.bf16.msra.mxu0 0
  %1609 = vmatprep.subr.bf16.mxu0 0
  %1610 = vmatpush2.bf16.msra.mxu0 0
  %1611 = vmatprep.mubr.bf16.mxu0 0
  %1612 = vmatmul.mubr.bf16.gmra.mxu0 %v1556
  %v1613 = vpop.f32.mrf.mxu0
  %v1614 = vadd.f32 %v1528, %v1613
  %v1615 = vpop.f32.mrf.mxu0
  %v1616 = vpop.f32.mrf.mxu0
  %v1617 = vadd.f32 %v1528, %v1616
  %v1618 = vpop.f32.mrf.mxu0
  %1619 = vmatprep.mubr.bf16.mxu0 0
  %1620 = vmatmul.mubr.bf16.gmra.mxu0 %v1559
  %v1621 = vpop.f32.mrf.mxu0
  %v1622 = vadd.f32 %v1528, %v1621
  %v1623 = vpop.f32.mrf.mxu0
  %v1624 = vpop.f32.mrf.mxu0
  %v1625 = vadd.f32 %v1528, %v1624
  %v1626 = vpop.f32.mrf.mxu0
  %1627 = vmatprep.mubr.bf16.mxu0 0
  %1628 = vmatmul.mubr.bf16.gmra.mxu0 %v1562
  %v1629 = vpop.f32.mrf.mxu0
  %v1630 = vadd.f32 %v1528, %v1629
  %v1631 = vpop.f32.mrf.mxu0
  %v1632 = vpop.f32.mrf.mxu0
  %v1633 = vadd.f32 %v1528, %v1632
  %v1634 = vpop.f32.mrf.mxu0
  %1635 = vmatprep.mubr.bf16.mxu0 0
  %1636 = vmatmul.mubr.bf16.gmra.mxu0 %v1565
  %v1637 = vpop.f32.mrf.mxu0
  %v1638 = vadd.f32 %v1528, %v1637
  %v1639 = vpop.f32.mrf.mxu0
  %v1640 = vpop.f32.mrf.mxu0
  %v1641 = vadd.f32 %v1528, %v1640
  %v1642 = vpop.f32.mrf.mxu0
  %1643 = vmatprep.mubr.bf16.mxu0 0
  %1644 = vmatmul.mubr.bf16.gmra.mxu0 %v1568
  %v1645 = vpop.f32.mrf.mxu0
  %v1646 = vadd.f32 %v1528, %v1645
  %v1647 = vpop.f32.mrf.mxu0
  %v1648 = vpop.f32.mrf.mxu0
  %v1649 = vadd.f32 %v1528, %v1648
  %v1650 = vpop.f32.mrf.mxu0
  %1651 = vmatprep.mubr.bf16.mxu0 0
  %1652 = vmatmul.mubr.bf16.gmra.mxu0 %v1571
  %v1653 = vpop.f32.mrf.mxu0
  %v1654 = vadd.f32 %v1528, %v1653
  %v1655 = vpop.f32.mrf.mxu0
  %v1656 = vpop.f32.mrf.mxu0
  %v1657 = vadd.f32 %v1528, %v1656
  %v1658 = vpop.f32.mrf.mxu0
  %1659 = vmatprep.mubr.bf16.mxu0 0
  %1660 = vmatmul.mubr.bf16.gmra.mxu0 %v1574
  %v1661 = vpop.f32.mrf.mxu0
  %v1662 = vadd.f32 %v1528, %v1661
  %v1663 = vpop.f32.mrf.mxu0
  %v1664 = vpop.f32.mrf.mxu0
  %v1665 = vadd.f32 %v1528, %v1664
  %v1666 = vpop.f32.mrf.mxu0
  %1667 = vmatprep.mubr.bf16.mxu0 0
  %1668 = vmatmul.mubr.bf16.gmra.mxu0 %v1577
  %v1669 = vpop.f32.mrf.mxu0
  %v1670 = vadd.f32 %v1528, %v1669
  %v1671 = vpop.f32.mrf.mxu0
  %v1672 = vpop.f32.mrf.mxu0
  %v1673 = vadd.f32 %v1528, %v1672
  %v1674 = vpop.f32.mrf.mxu0
  %1675 = vdwg.mxu0
  %v1676 = vmax.f32 %v1614, %v1617
  %v1677 = vrot.slane %v1676, 4
  %v1678 = vmax.f32 %v1676, %v1677
  %v1679 = vrot.slane %v1678, 2
  %v1680 = vmax.f32 %v1678, %v1679
  %v1681 = vrot.slane %v1680, 1
  %v1682 = vmax.f32 %v1680, %v1681
  %v1683 = vmax.f32 %v1622, %v1625
  %v1684 = vrot.slane %v1683, 4
  %v1685 = vmax.f32 %v1683, %v1684
  %v1686 = vrot.slane %v1685, 2
  %v1687 = vmax.f32 %v1685, %v1686
  %v1688 = vrot.slane %v1687, 1
  %v1689 = vmax.f32 %v1687, %v1688
  %v1690 = vmax.f32 %v1630, %v1633
  %v1691 = vrot.slane %v1690, 4
  %v1692 = vmax.f32 %v1690, %v1691
  %v1693 = vrot.slane %v1692, 2
  %v1694 = vmax.f32 %v1692, %v1693
  %v1695 = vrot.slane %v1694, 1
  %v1696 = vmax.f32 %v1694, %v1695
  %v1697 = vmax.f32 %v1638, %v1641
  %v1698 = vrot.slane %v1697, 4
  %v1699 = vmax.f32 %v1697, %v1698
  %v1700 = vrot.slane %v1699, 2
  %v1701 = vmax.f32 %v1699, %v1700
  %v1702 = vrot.slane %v1701, 1
  %v1703 = vmax.f32 %v1701, %v1702
  %v1704 = vmax.f32 %v1646, %v1649
  %v1705 = vrot.slane %v1704, 4
  %v1706 = vmax.f32 %v1704, %v1705
  %v1707 = vrot.slane %v1706, 2
  %v1708 = vmax.f32 %v1706, %v1707
  %v1709 = vrot.slane %v1708, 1
  %v1710 = vmax.f32 %v1708, %v1709
  %v1711 = vmax.f32 %v1654, %v1657
  %v1712 = vrot.slane %v1711, 4
  %v1713 = vmax.f32 %v1711, %v1712
  %v1714 = vrot.slane %v1713, 2
  %v1715 = vmax.f32 %v1713, %v1714
  %v1716 = vrot.slane %v1715, 1
  %v1717 = vmax.f32 %v1715, %v1716
  %v1718 = vmax.f32 %v1662, %v1665
  %v1719 = vrot.slane %v1718, 4
  %v1720 = vmax.f32 %v1718, %v1719
  %v1721 = vrot.slane %v1720, 2
  %v1722 = vmax.f32 %v1720, %v1721
  %v1723 = vrot.slane %v1722, 1
  %v1724 = vmax.f32 %v1722, %v1723
  %v1725 = vmax.f32 %v1670, %v1673
  %v1726 = vrot.slane %v1725, 4
  %v1727 = vmax.f32 %v1725, %v1726
  %v1728 = vrot.slane %v1727, 2
  %v1729 = vmax.f32 %v1727, %v1728
  %v1730 = vrot.slane %v1729, 1
  %v1731 = vmax.f32 %v1729, %v1730
  %v1732 = vpack.c.bf16 %v1682, %v1682
  %v1733 = vpack.c.bf16 %v1689, %v1689
  %v1734 = vpack.c.bf16 %v1696, %v1696
  %v1735 = vpack.c.bf16 %v1703, %v1703
  %v1736 = vpack.c.bf16 %v1710, %v1710
  %v1737 = vpack.c.bf16 %v1717, %v1717
  %v1738 = vpack.c.bf16 %v1724, %v1724
  %v1739 = vpack.c.bf16 %v1731, %v1731
  %v1740 = vld [vmem:[%s7] sm:$0xf]
  %v1741 = vld [vmem:[%s7 + $0x4] sm:$0xf]
  %v1742 = vld [vmem:[%s7 + $0x8] sm:$0xf]
  %v1743 = vld [vmem:[%s7 + $0xc] sm:$0xf]
  %v1744 = vld [vmem:[%s7 + $0x10] sm:$0xf]
  %v1745 = vld [vmem:[%s7 + $0x14] sm:$0xf]
  %v1746 = vld [vmem:[%s7 + $0x18] sm:$0xf]
  %v1747 = vld [vmem:[%s7 + $0x1c] sm:$0xf]
  %v1748 = vld [vmem:[%s7 + $0x20] sm:$0xf]
  %v1749 = vld [vmem:[%s7 + $0x24] sm:$0xf]
  %v1750 = vld [vmem:[%s7 + $0x28] sm:$0xf]
  %v1751 = vld [vmem:[%s7 + $0x2c] sm:$0xf]
  %v1752 = vld [vmem:[%s7 + $0x30] sm:$0xf]
  %v1753 = vld [vmem:[%s7 + $0x34] sm:$0xf]
  %v1754 = vld [vmem:[%s7 + $0x38] sm:$0xf]
  %v1755 = vld [vmem:[%s7 + $0x3c] sm:$0xf]
  %v1756 = vld [vmem:[%s8] sm:$0x1]
  %v1758 = vlaneseq
  %v1759 = vshrl.u32 %v1758, 7
  %v1760 = vsub.s32 0, %v1759
  %v1761 = vrot.slane %v1756, %v1760
  %v1771 = vunpack.c.l.b16 %v1732
  %v1772 = vunpack.c.l.b16 %v1733
  %v1773 = vunpack.c.l.b16 %v1734
  %v1774 = vunpack.c.l.b16 %v1735
  %v1775 = vunpack.c.l.b16 %v1736
  %v1776 = vunpack.c.l.b16 %v1737
  %v1777 = vunpack.c.l.b16 %v1738
  %v1778 = vunpack.c.l.b16 %v1739
  %vm1779 = vcmask 1041409
  %v1780 = vsel %vm1779, %v1772, %v1771
  %vm1781 = vcmask 1042434
  %v1782 = vsel %vm1781, %v1773, %v1780
  %vm1783 = vcmask 1043459
  %v1784 = vsel %vm1783, %v1774, %v1782
  %vm1785 = vcmask 1044484
  %v1786 = vsel %vm1785, %v1775, %v1784
  %vm1787 = vcmask 1045509
  %v1788 = vsel %vm1787, %v1776, %v1786
  %vm1789 = vcmask 1046534
  %v1790 = vsel %vm1789, %v1777, %v1788
  %vm1791 = vcmask 1047559
  %v1792 = vsel %vm1791, %v1778, %v1790
  %v1793 = vpack.c.b16 %v1792, %v1792
  %v1811 = vunpack.c.l.b16 %v1740
  %v1812 = vunpack.c.l.b16 %v1741
  %v1813 = vunpack.c.l.b16 %v1742
  %v1814 = vunpack.c.l.b16 %v1743
  %v1815 = vunpack.c.l.b16 %v1744
  %v1816 = vunpack.c.l.b16 %v1745
  %v1817 = vunpack.c.l.b16 %v1746
  %v1818 = vunpack.c.l.b16 %v1747
  %v1819 = vunpack.c.l.b16 %v1748
  %v1820 = vunpack.c.l.b16 %v1749
  %v1821 = vunpack.c.l.b16 %v1750
  %v1822 = vunpack.c.l.b16 %v1751
  %v1823 = vunpack.c.l.b16 %v1752
  %v1824 = vunpack.c.l.b16 %v1753
  %v1825 = vunpack.c.l.b16 %v1754
  %v1826 = vunpack.c.l.b16 %v1755
  %v1827 = vpack.c.b16 %v1812, %v1811
  %v1828 = vpack.c.b16 %v1814, %v1813
  %v1829 = vpack.c.b16 %v1816, %v1815
  %v1830 = vpack.c.b16 %v1818, %v1817
  %v1831 = vpack.c.b16 %v1820, %v1819
  %v1832 = vpack.c.b16 %v1822, %v1821
  %v1833 = vpack.c.b16 %v1824, %v1823
  %v1834 = vpack.c.b16 %v1826, %v1825
  %1843 = vmatprep.subr.bf16.mxu0 0
  %1844 = vmatpush1.bf16.msra.mxu0 %v1834
  %1845 = vmatprep.subr.bf16.mxu0 0
  %1846 = vmatpush1.bf16.msra.mxu0 %v1833
  %1847 = vmatprep.subr.bf16.mxu0 0
  %1848 = vmatpush1.bf16.msra.mxu0 %v1832
  %1849 = vmatprep.subr.bf16.mxu0 0
  %1850 = vmatpush1.bf16.msra.mxu0 %v1831
  %1851 = vmatprep.subr.bf16.mxu0 0
  %1852 = vmatpush1.bf16.msra.mxu0 %v1830
  %1853 = vmatprep.subr.bf16.mxu0 0
  %1854 = vmatpush1.bf16.msra.mxu0 %v1829
  %1855 = vmatprep.subr.bf16.mxu0 0
  %1856 = vmatpush1.bf16.msra.mxu0 %v1828
  %1857 = vmatprep.subr.bf16.mxu0 0
  %1858 = vmatpush1.bf16.msra.mxu0 %v1827
  %1859 = vmatprep.subr.bf16.mxu0 0
  %1860 = vmatpush2.bf16.msra.mxu0 0
  %1861 = vmatprep.subr.bf16.mxu0 0
  %1862 = vmatpush2.bf16.msra.mxu0 0
  %1863 = vmatprep.subr.bf16.mxu0 0
  %1864 = vmatpush2.bf16.msra.mxu0 0
  %1865 = vmatprep.subr.bf16.mxu0 0
  %1866 = vmatpush2.bf16.msra.mxu0 0
  %1867 = vmatprep.subr.bf16.mxu0 0
  %1868 = vmatpush2.bf16.msra.mxu0 0
  %1869 = vmatprep.subr.bf16.mxu0 0
  %1870 = vmatpush2.bf16.msra.mxu0 0
  %1871 = vmatprep.subr.bf16.mxu0 0
  %1872 = vmatpush2.bf16.msra.mxu0 0
  %1873 = vmatprep.subr.bf16.mxu0 0
  %1874 = vmatpush2.bf16.msra.mxu0 0
  %1875 = vmatprep.mubr.bf16.mxu0 0
  %1876 = vmatmul.mubr.bf16.gmra.mxu0 %v1793
  %v1877 = vpop.f32.mrf.mxu0
  %v1878 = vadd.f32 %v1761, %v1877
  %v1879 = vpop.f32.mrf.mxu0
  %v1880 = vpop.f32.mrf.mxu0
  %v1881 = vpop.f32.mrf.mxu0
  %1882 = vdwg.mxu0
  %1883 = vst [vmem:[%s9] sm:$0xff] %v1878
  // Predicated region
  $region38: #{mynet_forward.1} parent=0 // pred_check
    _
  $region39: #{mynet_forward.1} parent=0 // pred_check_branch
    %1885 = sbr.rel (0) target = $region41
  $region40: #{mynet_forward.1} parent=0 // pred_region
    _
  $region41: #{mynet_forward.1} parent=0 // pred_fallthru
    _
  // Predicated region
  $region42: #{mynet_forward.1} parent=0 // pred_check
    _
  $region43: #{mynet_forward.1} parent=0 // pred_check_branch
    %1887 = sbr.rel (0) target = $region45
  $region44: #{mynet_forward.1} parent=0 // pred_region
    _
  $region45: #{mynet_forward.1} parent=0 // pred_fallthru
    _

</llo_original>
